<compile_context>
chip_gen: v7x
topology: tpu7x:2x2x1
jax: 0.10.0
libtpu: 0.0.40
codegen_flags: <defaults>
</compile_context>

<pallas_src>
import functools

import jax
import jax.numpy as jnp
import numpy as np
from jax import lax
from jax.experimental import pallas as pl
from jax.experimental.pallas import tpu as pltpu

BN_EPS = 1e-5


# --------------------------------------------------------------------------- #
# Kernels
# --------------------------------------------------------------------------- #
def _row_conv3(zpad_ref, w_ref, *, H, compute_dtype):
    """3-tap vertical conv over rows of a lane-folded activation.

    zpad_ref: (H+2, K) f32 ref, rows 0 and H+1 are zero padding.
    w_ref:    (3, K, Nout) ref in compute_dtype; dx taps + input channels are
              pre-folded into K (block-Toeplitz), so the whole 3x3 conv is
              3 MXU matmuls with K = W*Cin and Nout = W*Cout.
    Returns (H, Nout) f32.
    """
    acc = jnp.dot(zpad_ref[0:H, :].astype(compute_dtype), w_ref[0],
                  preferred_element_type=jnp.float32)
    acc = acc + jnp.dot(zpad_ref[1:H + 1, :].astype(compute_dtype), w_ref[1],
                        preferred_element_type=jnp.float32)
    acc = acc + jnp.dot(zpad_ref[2:H + 2, :].astype(compute_dtype), w_ref[2],
                        preferred_element_type=jnp.float32)
    return acc


def _conv1_stats_kernel(xpad_ref, w_ref, y_ref, st_ref, *, H, compute_dtype):
    """conv1 on one image + per-image (sum, sum_sq) partials for BN1."""
    y = _row_conv3(xpad_ref, w_ref, H=H, compute_dtype=compute_dtype)  # (H, W*Co)
    y_ref[...] = y
    st_ref[0:1, :] = jnp.sum(y, axis=0, keepdims=True)
    st_ref[1:2, :] = jnp.sum(y * y, axis=0, keepdims=True)


def _bn1_conv2_stats_kernel(y1_ref, sc_ref, sh_ref, w_ref, y2_ref, st_ref,
                            zpad_ref, *, H, compute_dtype):
    """BN1 (precomputed scale/shift) + ReLU + conv2 + BN2 partials, one image."""
    z1 = jnp.maximum(y1_ref[...] * sc_ref[...] + sh_ref[...], 0.0)      # (H, W*Co)
    # Only the 1-row halo ring of the (H+2, W*Co) scratch is zeroed.
    zero_row = jnp.zeros((1, z1.shape[1]), jnp.float32)
    zpad_ref[0:1, :] = zero_row
    zpad_ref[H + 1:H + 2, :] = zero_row
    zpad_ref[1:H + 1, :] = z1
    y2 = _row_conv3(zpad_ref, w_ref, H=H, compute_dtype=compute_dtype)
    y2_ref[...] = y2
    st_ref[0:1, :] = jnp.sum(y2, axis=0, keepdims=True)
    st_ref[1:2, :] = jnp.sum(y2 * y2, axis=0, keepdims=True)


def _bn2_relu_kernel(y2_ref, sc_ref, sh_ref, out_ref):
    """Final BN2 (precomputed scale/shift) + ReLU, one image."""
    out_ref[...] = jnp.maximum(y2_ref[...] * sc_ref[...] + sh_ref[...], 0.0)


# --------------------------------------------------------------------------- #
# Wrapper-side layout plumbing (tiny, done once per call in XLA)
# --------------------------------------------------------------------------- #
def _build_row_weights(w_hwio, W):
    """Fold the 3 horizontal taps + input channels of a (3,3,Cin,Cout) HWIO kernel
    into a block-Toeplitz matrix (3, W*Cin, W*Cout) so a 3x3 'same' conv becomes
    3 matmuls over lane-folded (W*C) activations (SAME padding along W is encoded
    by the zero blocks of the matrix)."""
    _, _, Cin, Cout = w_hwio.shape
    wi = jnp.arange(W)[:, None]            # input column
    wo = jnp.arange(W)[None, :]            # output column
    dx = wi - wo + 1                       # kernel column, valid in [0, 2]
    valid = (dx >= 0) & (dx <= 2)
    taps = w_hwio[:, jnp.clip(dx, 0, 2), :, :]            # (3, W, W, Cin, Cout)
    taps = jnp.where(valid[None, :, :, None, None], taps, 0.0)
    # K index = wi*Cin + ci,  Nout index = wo*Cout + co
    return taps.transpose(0, 1, 3, 2, 4).reshape(3, W * Cin, W * Cout)


def _bn_affine_folded(stats, gamma, beta, count, W, Cout):
    """Finalize per-channel batch stats from per-image (sum, sum_sq) partials and
    fold the BN scale/shift into the (1, W*Cout) lane layout."""
    tot = jnp.sum(stats.astype(jnp.float32), axis=0)      # (2, W*Cout)
    ch_sum = tot[0].reshape(W, Cout).sum(axis=0)
    ch_sqs = tot[1].reshape(W, Cout).sum(axis=0)
    mean = ch_sum / count
    var = jnp.maximum(ch_sqs / count - mean * mean, 0.0)  # biased variance
    scale = gamma * lax.rsqrt(var + BN_EPS)
    shift = beta - mean * scale
    return (jnp.tile(scale, W)[None, :].astype(jnp.float32),
            jnp.tile(shift, W)[None, :].astype(jnp.float32))


def conv_block_forward(x_nhwc, params, compute_dtype=jnp.bfloat16):
    """x_nhwc: (N, H, W, Cin) f32. Returns (N, H, W, Cout) f32."""
    N, H, W, Cin = x_nhwc.shape
    Cout = params["w1"].shape[-1]
    WCi, WCo = W * Cin, W * Cout
    count = N * H * W

    # Lane-fold (W, C) into the last axis; pre-pad 1 zero row top/bottom for conv1.
    x_fold = x_nhwc.reshape(N, H, WCi)
    x_pad = jnp.pad(x_fold, ((0, 0), (1, 1), (0, 0)))

    w1_big = _build_row_weights(params["w1"], W).astype(compute_dtype)
    w2_big = _build_row_weights(params["w2"], W).astype(compute_dtype)
    # Conv biases (b1/b2) are intentionally not passed: they cancel in BN's mean.

    cparams = pltpu.CompilerParams(
        dimension_semantics=("parallel",),          # megacore on v7x
        vmem_limit_bytes=48 * 1024 * 1024,
    )
    # NOTE: at production H, this grid would also tile row-blocks with a 1-row halo.
    img_in = lambda shape: pl.BlockSpec((None,) + shape, lambda n: (n, 0, 0))
    const3 = lambda shape: pl.BlockSpec(shape, lambda n: (0, 0, 0))
    const2 = lambda shape: pl.BlockSpec(shape, lambda n: (0, 0))

    # ---- pass 1: conv1 + per-image BN1 partial sums ------------------------- #
    y1, st1 = pl.pallas_call(
        functools.partial(_conv1_stats_kernel, H=H, compute_dtype=compute_dtype),
        grid=(N,),
        in_specs=[img_in((H + 2, WCi)), const3((3, WCi, WCo))],
        out_specs=[img_in((H, WCo)), img_in((2, WCo))],
        out_shape=[jax.ShapeDtypeStruct((N, H, WCo), jnp.float32),
                   jax.ShapeDtypeStruct((N, 2, WCo), jnp.float32)],
        compiler_params=cparams,
    )(x_pad, w1_big)

    sc1, sh1 = _bn_affine_folded(st1, params["g1"], params["be1"], count, W, Cout)

    # ---- pass 2: BN1 + ReLU + conv2 + per-image BN2 partial sums ------------ #
    y2, st2 = pl.pallas_call(
        functools.partial(_bn1_conv2_stats_kernel, H=H, compute_dtype=compute_dtype),
        grid=(N,),
        in_specs=[img_in((H, WCo)), const2((1, WCo)), const2((1, WCo)),
                  const3((3, WCo, WCo))],
        out_specs=[img_in((H, WCo)), img_in((2, WCo))],
        out_shape=[jax.ShapeDtypeStruct((N, H, WCo), jnp.float32),
                   jax.ShapeDtypeStruct((N, 2, WCo), jnp.float32)],
        scratch_shapes=[pltpu.VMEM((H + 2, WCo), jnp.float32)],
        compiler_params=cparams,
    )(y1, sc1, sh1, w2_big)

    sc2, sh2 = _bn_affine_folded(st2, params["g2"], params["be2"], count, W, Cout)

    # ---- pass 3: BN2 + ReLU -------------------------------------------------- #
    out = pl.pallas_call(
        _bn2_relu_kernel,
        grid=(N,),
        in_specs=[img_in((H, WCo)), const2((1, WCo)), const2((1, WCo))],
        out_specs=img_in((H, WCo)),
        out_shape=jax.ShapeDtypeStruct((N, H, WCo), jnp.float32),
        compiler_params=cparams,
    )(y2, sc2, sh2)

    return out.reshape(N, H, W, Cout)


# --------------------------------------------------------------------------- #
# Pure-JAX reference (identical semantics, includes the redundant conv biases)
# --------------------------------------------------------------------------- #
def conv_block_reference(x_nhwc, params):
    dn = ("NHWC", "HWIO", "NHWC")

    def bn_relu(y, g, be):
        mean = y.mean(axis=(0, 1, 2))
        var = y.var(axis=(0, 1, 2))                  # biased, like torch BN forward
        xhat = (y - mean) * lax.rsqrt(var + BN_EPS)
        return jnp.maximum(g * xhat + be, 0.0)

    y1 = lax.conv_general_dilated(x_nhwc, params["w1"], (1, 1), "SAME",
                                  dimension_numbers=dn) + params["b1"]
    z1 = bn_relu(y1, params["g1"], params["be1"])
    y2 = lax.conv_general_dilated(z1, params["w2"], (1, 1), "SAME",
                                  dimension_numbers=dn) + params["b2"]
    return bn_relu(y2, params["g2"], params["be2"])


def init_params(key, in_channels, out_channels):
    ks = jax.random.split(key, 8)
    f32 = jnp.float32
    return {
        "w1": 0.1 * jax.random.normal(ks[0], (3, 3, in_channels, out_channels), f32),
        "b1": 0.1 * jax.random.normal(ks[1], (out_channels,), f32),
        "g1": 1.0 + 0.1 * jax.random.normal(ks[2], (out_channels,), f32),
        "be1": 0.1 * jax.random.normal(ks[3], (out_channels,), f32),
        "w2": 0.1 * jax.random.normal(ks[4], (3, 3, out_channels, out_channels), f32),
        "b2": 0.1 * jax.random.normal(ks[5], (out_channels,), f32),
        "g2": 1.0 + 0.1 * jax.random.normal(ks[6], (out_channels,), f32),
        "be2": 0.1 * jax.random.normal(ks[7], (out_channels,), f32),
    }


if __name__ == "__main__":
    key = jax.random.PRNGKey(0)
    k_x, k_p = jax.random.split(key)

    N, Cin, Cout, H, W = 2, 4, 8, 16, 16
    # PyTorch-style NCHW input, transposed to the kernels' NHWC layout.
    x_nchw = jax.random.normal(k_x, (N, Cin, H, W), jnp.float32)
    x_nhwc = jnp.transpose(x_nchw, (0, 2, 3, 1))

    params = init_params(k_p, Cin, Cout)

    out = jax.block_until_ready(jax.jit(conv_block_forward)(x_nhwc, params))
    ref = jax.block_until_ready(conv_block_reference(x_nhwc, params))

    # bf16 matmul operands (f32 accumulation) -> loosened tolerance vs f32 reference.
    np.testing.assert_allclose(np.asarray(out), np.asarray(ref),
                               rtol=3e-2, atol=3e-2)

    print("KERNEL_OK")
</pallas_src>

<mosaic_0001>
module attributes {stable_mosaic.version = 11 : i64} {
  func.func @_conv1_stats_kernel(%arg0: i32, %arg1: memref<1x18x64xf32, #tpu.memory_space<vmem>>, %arg2: memref<3x64x128xbf16, #tpu.memory_space<vmem>>, %arg3: memref<1x16x128xf32, #tpu.memory_space<vmem>>, %arg4: memref<1x2x128xf32, #tpu.memory_space<vmem>>) attributes {dimension_semantics = [#tpu.dimension_semantics<parallel>], iteration_bounds = array<i64: 2>, scalar_prefetch = 0 : i64, scratch_operands = 0 : i64, tpu.core_type = #tpu.core_type<tc>, window_params = [{transform_indices = @transform_0, window_bounds = array<i64: 1, 18, 64>}, {pipeline_mode = #tpu.pipeline_mode<synchronous>, transform_indices = @transform_1, window_bounds = array<i64: 3, 64, 128>}, {transform_indices = @transform_2, window_bounds = array<i64: 1, 16, 128>}, {transform_indices = @transform_3, window_bounds = array<i64: 1, 2, 128>}]} {
    %c0 = arith.constant 0 : index
    %c0_0 = arith.constant 0 : index
    %c0_1 = arith.constant 0 : index
    %0 = vector.load %arg1[%c0, %c0_0, %c0_1] : memref<1x18x64xf32, #tpu.memory_space<vmem>>, vector<1x16x64xf32>
    %1 = vector.shape_cast %0 : vector<1x16x64xf32> to vector<16x64xf32>
    %2 = arith.truncf %1 : vector<16x64xf32> to vector<16x64xbf16>
    %c0_2 = arith.constant 0 : index
    %c0_3 = arith.constant 0 : index
    %c0_4 = arith.constant 0 : index
    %3 = vector.load %arg2[%c0_2, %c0_3, %c0_4] : memref<3x64x128xbf16, #tpu.memory_space<vmem>>, vector<1x64x128xbf16>
    %4 = vector.shape_cast %3 : vector<1x64x128xbf16> to vector<64x128xbf16>
    %cst = arith.constant dense<0.000000e+00> : vector<16x128xf32>
    %5 = tpu.matmul %2, %4, %cst {dimension_numbers = #tpu.dot_dimension_numbers<[1], [0], [0], [1], [0, 0, 1, 1], [], []>} : vector<16x64xbf16>, vector<64x128xbf16>, vector<16x128xf32> -> vector<16x128xf32>
    %c0_5 = arith.constant 0 : index
    %c1 = arith.constant 1 : index
    %c0_6 = arith.constant 0 : index
    %6 = vector.load %arg1[%c0_5, %c1, %c0_6] : memref<1x18x64xf32, #tpu.memory_space<vmem>>, vector<1x16x64xf32>
    %7 = vector.shape_cast %6 : vector<1x16x64xf32> to vector<16x64xf32>
    %8 = arith.truncf %7 : vector<16x64xf32> to vector<16x64xbf16>
    %c1_7 = arith.constant 1 : index
    %c0_8 = arith.constant 0 : index
    %c0_9 = arith.constant 0 : index
    %9 = vector.load %arg2[%c1_7, %c0_8, %c0_9] : memref<3x64x128xbf16, #tpu.memory_space<vmem>>, vector<1x64x128xbf16>
    %10 = vector.shape_cast %9 : vector<1x64x128xbf16> to vector<64x128xbf16>
    %cst_10 = arith.constant dense<0.000000e+00> : vector<16x128xf32>
    %11 = tpu.matmul %8, %10, %cst_10 {dimension_numbers = #tpu.dot_dimension_numbers<[1], [0], [0], [1], [0, 0, 1, 1], [], []>} : vector<16x64xbf16>, vector<64x128xbf16>, vector<16x128xf32> -> vector<16x128xf32>
    %12 = arith.addf %5, %11 : vector<16x128xf32>
    %c0_11 = arith.constant 0 : index
    %c2 = arith.constant 2 : index
    %c0_12 = arith.constant 0 : index
    %13 = vector.load %arg1[%c0_11, %c2, %c0_12] : memref<1x18x64xf32, #tpu.memory_space<vmem>>, vector<1x16x64xf32>
    %14 = vector.shape_cast %13 : vector<1x16x64xf32> to vector<16x64xf32>
    %15 = arith.truncf %14 : vector<16x64xf32> to vector<16x64xbf16>
    %c2_13 = arith.constant 2 : index
    %c0_14 = arith.constant 0 : index
    %c0_15 = arith.constant 0 : index
    %16 = vector.load %arg2[%c2_13, %c0_14, %c0_15] : memref<3x64x128xbf16, #tpu.memory_space<vmem>>, vector<1x64x128xbf16>
    %17 = vector.shape_cast %16 : vector<1x64x128xbf16> to vector<64x128xbf16>
    %cst_16 = arith.constant dense<0.000000e+00> : vector<16x128xf32>
    %18 = tpu.matmul %15, %17, %cst_16 {dimension_numbers = #tpu.dot_dimension_numbers<[1], [0], [0], [1], [0, 0, 1, 1], [], []>} : vector<16x64xbf16>, vector<64x128xbf16>, vector<16x128xf32> -> vector<16x128xf32>
    %19 = arith.addf %12, %18 : vector<16x128xf32>
    %c0_17 = arith.constant 0 : index
    %c0_18 = arith.constant 0 : index
    %c0_19 = arith.constant 0 : index
    %20 = vector.load %arg3[%c0_17, %c0_18, %c0_19] : memref<1x16x128xf32, #tpu.memory_space<vmem>>, vector<1x16x128xf32>
    %21 = vector.shape_cast %20 : vector<1x16x128xf32> to vector<16x128xf32>
    %22 = vector.shape_cast %19 : vector<16x128xf32> to vector<1x16x128xf32>
    tpu.vector_store %arg3[%c0_17, %c0_18, %c0_19], %22 {strides = array<i32>} : memref<1x16x128xf32, #tpu.memory_space<vmem>>, vector<1x16x128xf32>,
    %cst_20 = arith.constant dense<0.000000e+00> : vector<128xf32>
    %23 = vector.multi_reduction <add>, %19, %cst_20 [0] : vector<16x128xf32> to vector<128xf32>
    %24 = vector.shape_cast %23 : vector<128xf32> to vector<1x128xf32>
    %c0_21 = arith.constant 0 : index
    %c0_22 = arith.constant 0 : index
    %c0_23 = arith.constant 0 : index
    %25 = vector.load %arg4[%c0_21, %c0_22, %c0_23] : memref<1x2x128xf32, #tpu.memory_space<vmem>>, vector<1x1x128xf32>
    %26 = vector.shape_cast %25 : vector<1x1x128xf32> to vector<1x128xf32>
    %27 = vector.shape_cast %24 : vector<1x128xf32> to vector<1x1x128xf32>
    tpu.vector_store %arg4[%c0_21, %c0_22, %c0_23], %27 {strides = array<i32>} : memref<1x2x128xf32, #tpu.memory_space<vmem>>, vector<1x1x128xf32>,
    %28 = arith.mulf %19, %19 : vector<16x128xf32>
    %cst_24 = arith.constant dense<0.000000e+00> : vector<128xf32>
    %29 = vector.multi_reduction <add>, %28, %cst_24 [0] : vector<16x128xf32> to vector<128xf32>
    %30 = vector.shape_cast %29 : vector<128xf32> to vector<1x128xf32>
    %c0_25 = arith.constant 0 : index
    %c1_26 = arith.constant 1 : index
    %c0_27 = arith.constant 0 : index
    %31 = vector.load %arg4[%c0_25, %c1_26, %c0_27] : memref<1x2x128xf32, #tpu.memory_space<vmem>>, vector<1x1x128xf32>
    %32 = vector.shape_cast %31 : vector<1x1x128xf32> to vector<1x128xf32>
    %33 = vector.shape_cast %30 : vector<1x128xf32> to vector<1x1x128xf32>
    tpu.vector_store %arg4[%c0_25, %c1_26, %c0_27], %33 {strides = array<i32>} : memref<1x2x128xf32, #tpu.memory_space<vmem>>, vector<1x1x128xf32>,
    return
  }
  func.func @transform_0(%arg0: i32) -> (i32, i32, i32) {
    %c0_i32 = arith.constant 0 : i32
    %c0_i32_0 = arith.constant 0 : i32
    %c0_i32_1 = arith.constant 0 : i32
    return %arg0, %c0_i32, %c0_i32_0 : i32, i32, i32
  }
  func.func @transform_1(%arg0: i32) -> (i32, i32, i32) {
    %c0_i32 = arith.constant 0 : i32
    %c0_i32_0 = arith.constant 0 : i32
    %c0_i32_1 = arith.constant 0 : i32
    %c0_i32_2 = arith.constant 0 : i32
    return %c0_i32, %c0_i32_0, %c0_i32_1 : i32, i32, i32
  }
  func.func @transform_2(%arg0: i32) -> (i32, i32, i32) {
    %c0_i32 = arith.constant 0 : i32
    %c0_i32_0 = arith.constant 0 : i32
    %c0_i32_1 = arith.constant 0 : i32
    return %arg0, %c0_i32, %c0_i32_0 : i32, i32, i32
  }
  func.func @transform_3(%arg0: i32) -> (i32, i32, i32) {
    %c0_i32 = arith.constant 0 : i32
    %c0_i32_0 = arith.constant 0 : i32
    %c0_i32_1 = arith.constant 0 : i32
    return %arg0, %c0_i32, %c0_i32_0 : i32, i32, i32
  }
}

module attributes {stable_mosaic.version = 11 : i64} {
  func.func @_bn1_conv2_stats_kernel(%arg0: i32, %arg1: memref<1x16x128xf32, #tpu.memory_space<vmem>>, %arg2: memref<1x128xf32, #tpu.memory_space<vmem>>, %arg3: memref<1x128xf32, #tpu.memory_space<vmem>>, %arg4: memref<3x128x128xbf16, #tpu.memory_space<vmem>>, %arg5: memref<1x16x128xf32, #tpu.memory_space<vmem>>, %arg6: memref<1x2x128xf32, #tpu.memory_space<vmem>>, %arg7: memref<18x128xf32, #tpu.memory_space<vmem>>) attributes {dimension_semantics = [#tpu.dimension_semantics<parallel>], iteration_bounds = array<i64: 2>, scalar_prefetch = 0 : i64, scratch_operands = 1 : i64, tpu.core_type = #tpu.core_type<tc>, window_params = [{transform_indices = @transform_0, window_bounds = array<i64: 1, 16, 128>}, {pipeline_mode = #tpu.pipeline_mode<synchronous>, transform_indices = @transform_1, window_bounds = array<i64: 1, 128>}, {pipeline_mode = #tpu.pipeline_mode<synchronous>, transform_indices = @transform_2, window_bounds = array<i64: 1, 128>}, {pipeline_mode = #tpu.pipeline_mode<synchronous>, transform_indices = @transform_3, window_bounds = array<i64: 3, 128, 128>}, {transform_indices = @transform_4, window_bounds = array<i64: 1, 16, 128>}, {transform_indices = @transform_5, window_bounds = array<i64: 1, 2, 128>}]} {
    %c0 = arith.constant 0 : index
    %c0_0 = arith.constant 0 : index
    %c0_1 = arith.constant 0 : index
    %0 = vector.load %arg1[%c0, %c0_0, %c0_1] : memref<1x16x128xf32, #tpu.memory_space<vmem>>, vector<1x16x128xf32>
    %1 = vector.shape_cast %0 : vector<1x16x128xf32> to vector<16x128xf32>
    %c0_2 = arith.constant 0 : index
    %c0_3 = arith.constant 0 : index
    %2 = vector.load %arg2[%c0_2, %c0_3] : memref<1x128xf32, #tpu.memory_space<vmem>>, vector<1x128xf32>
    %3 = vector.broadcast %2 : vector<1x128xf32> to vector<16x128xf32>
    %4 = arith.mulf %1, %3 : vector<16x128xf32>
    %c0_4 = arith.constant 0 : index
    %c0_5 = arith.constant 0 : index
    %5 = vector.load %arg3[%c0_4, %c0_5] : memref<1x128xf32, #tpu.memory_space<vmem>>, vector<1x128xf32>
    %6 = vector.broadcast %5 : vector<1x128xf32> to vector<16x128xf32>
    %7 = arith.addf %4, %6 : vector<16x128xf32>
    %cst = arith.constant 0.000000e+00 : f32
    %8 = vector.broadcast %cst : f32 to vector<16x128xf32>
    %9 = arith.maximumf %7, %8 : vector<16x128xf32>
    %cst_6 = arith.constant 0.000000e+00 : f32
    %10 = vector.broadcast %cst_6 : f32 to vector<1x128xf32>
    %c0_7 = arith.constant 0 : index
    %c0_8 = arith.constant 0 : index
    %11 = vector.load %arg7[%c0_7, %c0_8] : memref<18x128xf32, #tpu.memory_space<vmem>>, vector<1x128xf32>
    tpu.vector_store %arg7[%c0_7, %c0_8], %10 {strides = array<i32>} : memref<18x128xf32, #tpu.memory_space<vmem>>, vector<1x128xf32>,
    %c17 = arith.constant 17 : index
    %c0_9 = arith.constant 0 : index
    %12 = vector.load %arg7[%c17, %c0_9] : memref<18x128xf32, #tpu.memory_space<vmem>>, vector<1x128xf32>
    tpu.vector_store %arg7[%c17, %c0_9], %10 {strides = array<i32>} : memref<18x128xf32, #tpu.memory_space<vmem>>, vector<1x128xf32>,
    %c1 = arith.constant 1 : index
    %c0_10 = arith.constant 0 : index
    %13 = vector.load %arg7[%c1, %c0_10] : memref<18x128xf32, #tpu.memory_space<vmem>>, vector<16x128xf32>
    tpu.vector_store %arg7[%c1, %c0_10], %9 {strides = array<i32>} : memref<18x128xf32, #tpu.memory_space<vmem>>, vector<16x128xf32>,
    %c0_11 = arith.constant 0 : index
    %c0_12 = arith.constant 0 : index
    %14 = vector.load %arg7[%c0_11, %c0_12] : memref<18x128xf32, #tpu.memory_space<vmem>>, vector<16x128xf32>
    %15 = arith.truncf %14 : vector<16x128xf32> to vector<16x128xbf16>
    %c0_13 = arith.constant 0 : index
    %c0_14 = arith.constant 0 : index
    %c0_15 = arith.constant 0 : index
    %16 = vector.load %arg4[%c0_13, %c0_14, %c0_15] : memref<3x128x128xbf16, #tpu.memory_space<vmem>>, vector<1x128x128xbf16>
    %17 = vector.shape_cast %16 : vector<1x128x128xbf16> to vector<128x128xbf16>
    %cst_16 = arith.constant dense<0.000000e+00> : vector<16x128xf32>
    %18 = tpu.matmul %15, %17, %cst_16 {dimension_numbers = #tpu.dot_dimension_numbers<[1], [0], [0], [1], [0, 0, 1, 1], [], []>} : vector<16x128xbf16>, vector<128x128xbf16>, vector<16x128xf32> -> vector<16x128xf32>
    %c1_17 = arith.constant 1 : index
    %c0_18 = arith.constant 0 : index
    %19 = vector.load %arg7[%c1_17, %c0_18] : memref<18x128xf32, #tpu.memory_space<vmem>>, vector<16x128xf32>
    %20 = arith.truncf %19 : vector<16x128xf32> to vector<16x128xbf16>
    %c1_19 = arith.constant 1 : index
    %c0_20 = arith.constant 0 : index
    %c0_21 = arith.constant 0 : index
    %21 = vector.load %arg4[%c1_19, %c0_20, %c0_21] : memref<3x128x128xbf16, #tpu.memory_space<vmem>>, vector<1x128x128xbf16>
    %22 = vector.shape_cast %21 : vector<1x128x128xbf16> to vector<128x128xbf16>
    %cst_22 = arith.constant dense<0.000000e+00> : vector<16x128xf32>
    %23 = tpu.matmul %20, %22, %cst_22 {dimension_numbers = #tpu.dot_dimension_numbers<[1], [0], [0], [1], [0, 0, 1, 1], [], []>} : vector<16x128xbf16>, vector<128x128xbf16>, vector<16x128xf32> -> vector<16x128xf32>
    %24 = arith.addf %18, %23 : vector<16x128xf32>
    %c2 = arith.constant 2 : index
    %c0_23 = arith.constant 0 : index
    %25 = vector.load %arg7[%c2, %c0_23] : memref<18x128xf32, #tpu.memory_space<vmem>>, vector<16x128xf32>
    %26 = arith.truncf %25 : vector<16x128xf32> to vector<16x128xbf16>
    %c2_24 = arith.constant 2 : index
    %c0_25 = arith.constant 0 : index
    %c0_26 = arith.constant 0 : index
    %27 = vector.load %arg4[%c2_24, %c0_25, %c0_26] : memref<3x128x128xbf16, #tpu.memory_space<vmem>>, vector<1x128x128xbf16>
    %28 = vector.shape_cast %27 : vector<1x128x128xbf16> to vector<128x128xbf16>
    %cst_27 = arith.constant dense<0.000000e+00> : vector<16x128xf32>
    %29 = tpu.matmul %26, %28, %cst_27 {dimension_numbers = #tpu.dot_dimension_numbers<[1], [0], [0], [1], [0, 0, 1, 1], [], []>} : vector<16x128xbf16>, vector<128x128xbf16>, vector<16x128xf32> -> vector<16x128xf32>
    %30 = arith.addf %24, %29 : vector<16x128xf32>
    %c0_28 = arith.constant 0 : index
    %c0_29 = arith.constant 0 : index
    %c0_30 = arith.constant 0 : index
    %31 = vector.load %arg5[%c0_28, %c0_29, %c0_30] : memref<1x16x128xf32, #tpu.memory_space<vmem>>, vector<1x16x128xf32>
    %32 = vector.shape_cast %31 : vector<1x16x128xf32> to vector<16x128xf32>
    %33 = vector.shape_cast %30 : vector<16x128xf32> to vector<1x16x128xf32>
    tpu.vector_store %arg5[%c0_28, %c0_29, %c0_30], %33 {strides = array<i32>} : memref<1x16x128xf32, #tpu.memory_space<vmem>>, vector<1x16x128xf32>,
    %cst_31 = arith.constant dense<0.000000e+00> : vector<128xf32>
    %34 = vector.multi_reduction <add>, %30, %cst_31 [0] : vector<16x128xf32> to vector<128xf32>
    %35 = vector.shape_cast %34 : vector<128xf32> to vector<1x128xf32>
    %c0_32 = arith.constant 0 : index
    %c0_33 = arith.constant 0 : index
    %c0_34 = arith.constant 0 : index
    %36 = vector.load %arg6[%c0_32, %c0_33, %c0_34] : memref<1x2x128xf32, #tpu.memory_space<vmem>>, vector<1x1x128xf32>
    %37 = vector.shape_cast %36 : vector<1x1x128xf32> to vector<1x128xf32>
    %38 = vector.shape_cast %35 : vector<1x128xf32> to vector<1x1x128xf32>
    tpu.vector_store %arg6[%c0_32, %c0_33, %c0_34], %38 {strides = array<i32>} : memref<1x2x128xf32, #tpu.memory_space<vmem>>, vector<1x1x128xf32>,
    %39 = arith.mulf %30, %30 : vector<16x128xf32>
    %cst_35 = arith.constant dense<0.000000e+00> : vector<128xf32>
    %40 = vector.multi_reduction <add>, %39, %cst_35 [0] : vector<16x128xf32> to vector<128xf32>
    %41 = vector.shape_cast %40 : vector<128xf32> to vector<1x128xf32>
    %c0_36 = arith.constant 0 : index
    %c1_37 = arith.constant 1 : index
    %c0_38 = arith.constant 0 : index
    %42 = vector.load %arg6[%c0_36, %c1_37, %c0_38] : memref<1x2x128xf32, #tpu.memory_space<vmem>>, vector<1x1x128xf32>
    %43 = vector.shape_cast %42 : vector<1x1x128xf32> to vector<1x128xf32>
    %44 = vector.shape_cast %41 : vector<1x128xf32> to vector<1x1x128xf32>
    tpu.vector_store %arg6[%c0_36, %c1_37, %c0_38], %44 {strides = array<i32>} : memref<1x2x128xf32, #tpu.memory_space<vmem>>, vector<1x1x128xf32>,
    return
  }
  func.func @transform_0(%arg0: i32) -> (i32, i32, i32) {
    %c0_i32 = arith.constant 0 : i32
    %c0_i32_0 = arith.constant 0 : i32
    %c0_i32_1 = arith.constant 0 : i32
    return %arg0, %c0_i32, %c0_i32_0 : i32, i32, i32
  }
  func.func @transform_1(%arg0: i32) -> (i32, i32) {
    %c0_i32 = arith.constant 0 : i32
    %c0_i32_0 = arith.constant 0 : i32
    %c0_i32_1 = arith.constant 0 : i32
    return %c0_i32, %c0_i32_0 : i32, i32
  }
  func.func @transform_2(%arg0: i32) -> (i32, i32) {
    %c0_i32 = arith.constant 0 : i32
    %c0_i32_0 = arith.constant 0 : i32
    %c0_i32_1 = arith.constant 0 : i32
    return %c0_i32, %c0_i32_0 : i32, i32
  }
  func.func @transform_3(%arg0: i32) -> (i32, i32, i32) {
    %c0_i32 = arith.constant 0 : i32
    %c0_i32_0 = arith.constant 0 : i32
    %c0_i32_1 = arith.constant 0 : i32
    %c0_i32_2 = arith.constant 0 : i32
    return %c0_i32, %c0_i32_0, %c0_i32_1 : i32, i32, i32
  }
  func.func @transform_4(%arg0: i32) -> (i32, i32, i32) {
    %c0_i32 = arith.constant 0 : i32
    %c0_i32_0 = arith.constant 0 : i32
    %c0_i32_1 = arith.constant 0 : i32
    return %arg0, %c0_i32, %c0_i32_0 : i32, i32, i32
  }
  func.func @transform_5(%arg0: i32) -> (i32, i32, i32) {
    %c0_i32 = arith.constant 0 : i32
    %c0_i32_0 = arith.constant 0 : i32
    %c0_i32_1 = arith.constant 0 : i32
    return %arg0, %c0_i32, %c0_i32_0 : i32, i32, i32
  }
}

module attributes {stable_mosaic.version = 11 : i64} {
  func.func @_bn2_relu_kernel(%arg0: i32, %arg1: memref<1x16x128xf32, #tpu.memory_space<vmem>>, %arg2: memref<1x128xf32, #tpu.memory_space<vmem>>, %arg3: memref<1x128xf32, #tpu.memory_space<vmem>>, %arg4: memref<1x16x128xf32, #tpu.memory_space<vmem>>) attributes {dimension_semantics = [#tpu.dimension_semantics<parallel>], iteration_bounds = array<i64: 2>, scalar_prefetch = 0 : i64, scratch_operands = 0 : i64, tpu.core_type = #tpu.core_type<tc>, window_params = [{transform_indices = @transform_0, window_bounds = array<i64: 1, 16, 128>}, {pipeline_mode = #tpu.pipeline_mode<synchronous>, transform_indices = @transform_1, window_bounds = array<i64: 1, 128>}, {pipeline_mode = #tpu.pipeline_mode<synchronous>, transform_indices = @transform_2, window_bounds = array<i64: 1, 128>}, {transform_indices = @transform_3, window_bounds = array<i64: 1, 16, 128>}]} {
    %c0 = arith.constant 0 : index
    %c0_0 = arith.constant 0 : index
    %c0_1 = arith.constant 0 : index
    %0 = vector.load %arg1[%c0, %c0_0, %c0_1] : memref<1x16x128xf32, #tpu.memory_space<vmem>>, vector<1x16x128xf32>
    %1 = vector.shape_cast %0 : vector<1x16x128xf32> to vector<16x128xf32>
    %c0_2 = arith.constant 0 : index
    %c0_3 = arith.constant 0 : index
    %2 = vector.load %arg2[%c0_2, %c0_3] : memref<1x128xf32, #tpu.memory_space<vmem>>, vector<1x128xf32>
    %3 = vector.broadcast %2 : vector<1x128xf32> to vector<16x128xf32>
    %4 = arith.mulf %1, %3 : vector<16x128xf32>
    %c0_4 = arith.constant 0 : index
    %c0_5 = arith.constant 0 : index
    %5 = vector.load %arg3[%c0_4, %c0_5] : memref<1x128xf32, #tpu.memory_space<vmem>>, vector<1x128xf32>
    %6 = vector.broadcast %5 : vector<1x128xf32> to vector<16x128xf32>
    %7 = arith.addf %4, %6 : vector<16x128xf32>
    %cst = arith.constant 0.000000e+00 : f32
    %8 = vector.broadcast %cst : f32 to vector<16x128xf32>
    %9 = arith.maximumf %7, %8 : vector<16x128xf32>
    %c0_6 = arith.constant 0 : index
    %c0_7 = arith.constant 0 : index
    %c0_8 = arith.constant 0 : index
    %10 = vector.load %arg4[%c0_6, %c0_7, %c0_8] : memref<1x16x128xf32, #tpu.memory_space<vmem>>, vector<1x16x128xf32>
    %11 = vector.shape_cast %10 : vector<1x16x128xf32> to vector<16x128xf32>
    %12 = vector.shape_cast %9 : vector<16x128xf32> to vector<1x16x128xf32>
    tpu.vector_store %arg4[%c0_6, %c0_7, %c0_8], %12 {strides = array<i32>} : memref<1x16x128xf32, #tpu.memory_space<vmem>>, vector<1x16x128xf32>,
    return
  }
  func.func @transform_0(%arg0: i32) -> (i32, i32, i32) {
    %c0_i32 = arith.constant 0 : i32
    %c0_i32_0 = arith.constant 0 : i32
    %c0_i32_1 = arith.constant 0 : i32
    return %arg0, %c0_i32, %c0_i32_0 : i32, i32, i32
  }
  func.func @transform_1(%arg0: i32) -> (i32, i32) {
    %c0_i32 = arith.constant 0 : i32
    %c0_i32_0 = arith.constant 0 : i32
    %c0_i32_1 = arith.constant 0 : i32
    return %c0_i32, %c0_i32_0 : i32, i32
  }
  func.func @transform_2(%arg0: i32) -> (i32, i32) {
    %c0_i32 = arith.constant 0 : i32
    %c0_i32_0 = arith.constant 0 : i32
    %c0_i32_1 = arith.constant 0 : i32
    return %c0_i32, %c0_i32_0 : i32, i32
  }
  func.func @transform_3(%arg0: i32) -> (i32, i32, i32) {
    %c0_i32 = arith.constant 0 : i32
    %c0_i32_0 = arith.constant 0 : i32
    %c0_i32_1 = arith.constant 0 : i32
    return %arg0, %c0_i32, %c0_i32_0 : i32, i32, i32
  }
}

</mosaic_0001>

<llo_original>
// kernel: conv_block_forward.3
$region0: #{conv_block_forward.3}
  #allocation0 [shape = 'u32[]', space=smem, size = 0x4, offset = 0x4, fixed_abs, tag = 'smem constant byte address 0x4 - core index']
  #allocation1 [shape = 'u32[144,128]{1,0:T(1,128)}', space=vmem, size = 0x12000, scoped, tag = 'internal scratch']
  %s0 = inlined_call_operand.vmem [shape: f32[2,18,64], index: 0, kind: input, shape index: {}]
  %s1 = inlined_call_operand.vmem [shape: bf16[3,64,128], index: 1, kind: input, shape index: {}]
  %s2 = inlined_call_operand.vmem [shape: f32[2,16,128], index: 2, kind: output, shape index: {0}]
  %s3 = inlined_call_operand.vmem [shape: f32[2,2,128], index: 3, kind: output, shape index: {1}]
  %4 = xla_tuple %s2, %s3
  %s5 = sld [smem:[#allocation0]]
  $region49: #{conv_block_forward.3} parent=0
    _
  %s7 = ssub.s32 1, %s5
  %s8 = scalar_select 0, %s7, %s5
  loop: start=0, step=1, limit=4
  $region2: #{conv_block_forward.3} parent=0 // loop_pre_header
    _
  $region3: #{conv_block_forward.3} parent=0 // loop_header
    %s10 = sphi 0, %s14
    %p11 = scmp.ge.s32.totalorder %s10, 4
    %s20 = sphi 0, %s22
    %s23 = sphi 0, %s20
    %s24 = sphi 0, %s23
    %s40 = sphi 0, %s24
    %s44 = sphi 0, %s44
    %s46 = sphi 0, %s44
    %s47 = sphi 0, %s46
    %s61 = sphi 0, %s47
    %s67 = sphi 0, %s69
    %s70 = sphi 0, %s67
    %s71 = sphi 0, %s70
    %s87 = sphi 0, %s71
    %s93 = sphi 0, %s95
    %s96 = sphi 0, %s93
    %s97 = sphi 0, %s96
    %s113 = sphi 0, %s97
  $region4: #{conv_block_forward.3} parent=0 // loop_header_branch
    %13 = sbr.rel (%p11) target = $region8
  $region5: #{conv_block_forward.3} parent=0 // loop_body
    %s15 = ssub.s32 %s10, 1
    %s16 = ssub.s32 %s10, 2
    %s17 = sadd.s32 %s10, 1
    %s18 = ssub.s32 %s10, %s17
    %p19 = scmp.eq.s32.totalorder %s18, 0
    %s21 = sadd.s32 %s20, 1
    %s22 = scalar_select %p19, %s20, %s21
    %p25 = pneg %p19
    %p26 = scmp.eq.s32.totalorder %s10, 1
    %p27 = por %p25, %p26
    %p28 = scmp.ne.s32.totalorder %s20, %s23
    %p29 = scmp.eq.s32.totalorder %s10, 0
    %p30 = por %p28, %p29
    %p31 = scmp.ne.s32.totalorder %s20, %s23
    %p32 = scmp.eq.s32.totalorder %s15, 1
    %p33 = por %p31, %p32
    %p34 = scmp.ne.s32.totalorder %s23, %s24
    %p35 = scmp.eq.s32.totalorder %s15, 0
    %p36 = por %p34, %p35
    %p37 = scmp.ne.s32.totalorder %s23, %s24
    %p38 = scmp.eq.s32.totalorder %s16, 1
    %p39 = por %p37, %p38
    %p41 = scmp.ne.s32.totalorder %s24, %s40
    %p42 = scmp.eq.s32.totalorder %s16, 0
    %p43 = por %p41, %p42
    %s45 = sadd.s32 %s44, 1
    %p48 = scmp.eq.s32.totalorder %s10, 1
    %p49 = scmp.ne.s32.totalorder %s44, %s46
    %p50 = scmp.eq.s32.totalorder %s10, 0
    %p51 = por %p49, %p50
    %p52 = scmp.ne.s32.totalorder %s44, %s46
    %p53 = scmp.eq.s32.totalorder %s15, 1
    %p54 = por %p52, %p53
    %p55 = scmp.ne.s32.totalorder %s46, %s47
    %p56 = scmp.eq.s32.totalorder %s15, 0
    %p57 = por %p55, %p56
    %p58 = scmp.ne.s32.totalorder %s46, %s47
    %p59 = scmp.eq.s32.totalorder %s16, 1
    %p60 = por %p58, %p59
    %p62 = scmp.ne.s32.totalorder %s47, %s61
    %p63 = scmp.eq.s32.totalorder %s16, 0
    %p64 = por %p62, %p63
    %s65 = ssub.s32 %s10, %s17
    %p66 = scmp.eq.s32.totalorder %s65, 0
    %s68 = sadd.s32 %s67, 1
    %s69 = scalar_select %p66, %s67, %s68
    %p72 = pneg %p66
    %p73 = scmp.eq.s32.totalorder %s10, 1
    %p74 = por %p72, %p73
    %p75 = scmp.ne.s32.totalorder %s67, %s70
    %p76 = scmp.eq.s32.totalorder %s10, 0
    %p77 = por %p75, %p76
    %p78 = scmp.ne.s32.totalorder %s67, %s70
    %p79 = scmp.eq.s32.totalorder %s15, 1
    %p80 = por %p78, %p79
    %p81 = scmp.ne.s32.totalorder %s70, %s71
    %p82 = scmp.eq.s32.totalorder %s15, 0
    %p83 = por %p81, %p82
    %p84 = scmp.ne.s32.totalorder %s70, %s71
    %p85 = scmp.eq.s32.totalorder %s16, 1
    %p86 = por %p84, %p85
    %p88 = scmp.ne.s32.totalorder %s71, %s87
    %p89 = scmp.eq.s32.totalorder %s16, 0
    %p90 = por %p88, %p89
    %s91 = ssub.s32 %s10, %s17
    %p92 = scmp.eq.s32.totalorder %s91, 0
    %s94 = sadd.s32 %s93, 1
    %s95 = scalar_select %p92, %s93, %s94
    %p98 = pneg %p92
    %p99 = scmp.eq.s32.totalorder %s10, 1
    %p100 = por %p98, %p99
    %p101 = scmp.ne.s32.totalorder %s93, %s96
    %p102 = scmp.eq.s32.totalorder %s10, 0
    %p103 = por %p101, %p102
    %p104 = scmp.ne.s32.totalorder %s93, %s96
    %p105 = scmp.eq.s32.totalorder %s15, 1
    %p106 = por %p104, %p105
    %p107 = scmp.ne.s32.totalorder %s96, %s97
    %p108 = scmp.eq.s32.totalorder %s15, 0
    %p109 = por %p107, %p108
    %p110 = scmp.ne.s32.totalorder %s96, %s97
    %p111 = scmp.eq.s32.totalorder %s16, 1
    %p112 = por %p110, %p111
    %p114 = scmp.ne.s32.totalorder %s97, %s113
    %p115 = scmp.eq.s32.totalorder %s16, 0
    %p116 = por %p114, %p115
    %p117 = scmp.le.s32.totalorder 1, %s10
    %p118 = scmp.lt.s32.totalorder %s10, 3
    %p119 = pnand %p117, %p118
    %p120 = pneg %p119
    // Predicated region
    $region9: #{conv_block_forward.3} parent=5 // pred_check
      _
    $region10: #{conv_block_forward.3} parent=5 // pred_check_branch
      %122 = sbr.rel (%p119) target = $region12
    $region11: #{conv_block_forward.3} parent=5 // pred_region
      %s123 = ssub.s32 %s10, 1
      // Predicated region
      $region13: #{conv_block_forward.3} parent=11 // pred_check
        %p124 = pneg %p57
      $region14: #{conv_block_forward.3} parent=11 // pred_check_branch
        %126 = sbr.rel (%p124) target = $region16
      $region15: #{conv_block_forward.3} parent=11 // pred_region
        _
      $region16: #{conv_block_forward.3} parent=11 // pred_fallthru
        _
    $region12: #{conv_block_forward.3} parent=5 // pred_fallthru
      _
    %p127 = scmp.lt.s32.totalorder %s10, 2
    // Predicated region
    $region17: #{conv_block_forward.3} parent=5 // pred_check
      %p128 = pneg %p127
    $region18: #{conv_block_forward.3} parent=5 // pred_check_branch
      %130 = sbr.rel (%p128) target = $region20
    $region19: #{conv_block_forward.3} parent=5 // pred_region
      // Predicated region
      $region21: #{conv_block_forward.3} parent=19 // pred_check
        %p131 = pneg %p30
      $region22: #{conv_block_forward.3} parent=19 // pred_check_branch
        %133 = sbr.rel (%p131) target = $region24
      $region23: #{conv_block_forward.3} parent=19 // pred_region
        %p134 = scmp.lt.s32.totalorder %s10, 1
        %s135 = scalar_select %p134, %s10, 1
        %s136 = smul.addr %s135, 3
        %s137 = smul.addr %s136, 8
        %s138 = scalar_lea.vmem %s0, %s137
      $region24: #{conv_block_forward.3} parent=19 // pred_fallthru
        _
    $region20: #{conv_block_forward.3} parent=5 // pred_fallthru
      _
    %p139 = scmp.le.s32.totalorder 1, %s10
    %p140 = scmp.lt.s32.totalorder %s10, 3
    %p141 = pnand %p139, %p140
    %p142 = pneg %p141
    // Predicated region
    $region25: #{conv_block_forward.3} parent=5 // pred_check
      _
    $region26: #{conv_block_forward.3} parent=5 // pred_check_branch
      %144 = sbr.rel (%p141) target = $region28
    $region27: #{conv_block_forward.3} parent=5 // pred_region
      %s145 = ssub.s32 %s10, 1
      %p146 = scmp.lt.s32.totalorder %s15, 1
      %s147 = scalar_select %p146, %s15, 1
      %s148 = smul.addr %s147, 3
      %s149 = smul.addr %s148, 8
      %s150 = scalar_lea.vmem %s0, %s149
      %p151 = pneg %p36
      %p152 = pneg %p33
      %p153 = pneg %p57
      %p154 = pneg %p54
      %p155 = pneg %p83
      %p156 = pneg %p80
      %p157 = scmp.lt.s32.totalorder %s15, 1
      %s158 = scalar_select %p157, %s15, 1
      %s159 = smul.addr %s158, 2
      %s160 = smul.addr %s159, 8
      %s161 = scalar_lea.vmem %s2, %s160
      %p162 = pneg %p109
      %p163 = pneg %p106
      %p164 = scmp.lt.s32.totalorder %s15, 1
      %s165 = scalar_select %p164, %s15, 1
      %s166 = smul.addr %s165, 2
      %s167 = scalar_lea.vmem %s3, %s166
      %p168 = scmp.lt.s32.totalorder %s15, 1
      %s169 = scalar_select %p168, %s15, 1
      %s170 = smul.addr %s169, 3
      %s171 = smul.addr %s170, 8
      %s172 = scalar_lea.vmem %s0, %s171
      %p173 = scmp.lt.s32.totalorder %s15, 1
      %s174 = scalar_select %p173, %s15, 1
      %s175 = smul.addr %s174, 2
      %s176 = smul.addr %s175, 8
      %s177 = scalar_lea.vmem %s2, %s176
      %p178 = scmp.lt.s32.totalorder %s15, 1
      %s179 = scalar_select %p178, %s15, 1
      %s180 = smul.addr %s179, 2
      %s181 = scalar_lea.vmem %s3, %s180
      %v183 = vld [vmem:[%s172] sm:$0xff]
      %v184 = vld [vmem:[%s172 + $0x8] sm:$0xff]
      %v185 = vpack.c.bf16 %v184, %v183
      %v186 = vld [vmem:[%s1] sm:$0xf]
      %v187 = vld [vmem:[%s1 + $0x4] sm:$0xf]
      %v188 = vld [vmem:[%s1 + $0x8] sm:$0xf]
      %v189 = vld [vmem:[%s1 + $0xc] sm:$0xf]
      %v190 = vld [vmem:[%s1 + $0x10] sm:$0xf]
      %v191 = vld [vmem:[%s1 + $0x14] sm:$0xf]
      %v192 = vld [vmem:[%s1 + $0x18] sm:$0xf]
      %v193 = vld [vmem:[%s1 + $0x1c] sm:$0xf]
      %v194 = vld [vmem:[%s172 + $0x1] sm:$0xff]
      %v195 = vld [vmem:[%s172 + $0x9] sm:$0xff]
      %v196 = vpack.c.bf16 %v195, %v194
      %s197 = scalar_lea.vmem %s1, 32
      %v198 = vld [vmem:[%s197] sm:$0xf]
      %v199 = vld [vmem:[%s197 + $0x4] sm:$0xf]
      %v200 = vld [vmem:[%s197 + $0x8] sm:$0xf]
      %v201 = vld [vmem:[%s197 + $0xc] sm:$0xf]
      %v202 = vld [vmem:[%s197 + $0x10] sm:$0xf]
      %v203 = vld [vmem:[%s197 + $0x14] sm:$0xf]
      %v204 = vld [vmem:[%s197 + $0x18] sm:$0xf]
      %v205 = vld [vmem:[%s197 + $0x1c] sm:$0xf]
      %v214 = vunpack.c.l.b16 %v198
      %v215 = vunpack.c.l.b16 %v199
      %v216 = vunpack.c.l.b16 %v200
      %v217 = vunpack.c.l.b16 %v201
      %v218 = vunpack.c.l.b16 %v202
      %v219 = vunpack.c.l.b16 %v203
      %v220 = vunpack.c.l.b16 %v204
      %v221 = vunpack.c.l.b16 %v205
      %v222 = vpack.c.b16 %v215, %v214
      %v223 = vpack.c.b16 %v217, %v216
      %v224 = vpack.c.b16 %v219, %v218
      %v225 = vpack.c.b16 %v221, %v220
      %vm230 = vcmask 523264
      %v232 = vsel %vm230, %v196, 0
      %234 = vmatprep.subr.bf16.mxu0 0
      %235 = vmatpush1.bf16.msra.mxu0 %v222
      %236 = vmatprep.subr.bf16.mxu0 0
      %237 = vmatpush1.bf16.msra.mxu0 %v223
      %238 = vmatprep.subr.bf16.mxu0 0
      %239 = vmatpush1.bf16.msra.mxu0 %v224
      %240 = vmatprep.subr.bf16.mxu0 0
      %241 = vmatpush1.bf16.msra.mxu0 %v225
      %242 = vmatprep.subr.bf16.mxu0 0
      %243 = vmatpush1.bf16.msra.mxu0 0
      %244 = vmatprep.subr.bf16.mxu0 0
      %245 = vmatpush1.bf16.msra.mxu0 0
      %246 = vmatprep.subr.bf16.mxu0 0
      %247 = vmatpush1.bf16.msra.mxu0 0
      %248 = vmatprep.subr.bf16.mxu0 0
      %249 = vmatpush1.bf16.msra.mxu0 0
      %250 = vmatprep.subr.bf16.mxu0 0
      %251 = vmatpush1.bf16.msra.mxu0 0
      %252 = vmatprep.subr.bf16.mxu0 0
      %253 = vmatpush1.bf16.msra.mxu0 0
      %254 = vmatprep.subr.bf16.mxu0 0
      %255 = vmatpush1.bf16.msra.mxu0 0
      %256 = vmatprep.subr.bf16.mxu0 0
      %257 = vmatpush1.bf16.msra.mxu0 0
      %258 = vmatprep.subr.bf16.mxu0 0
      %259 = vmatpush1.bf16.msra.mxu0 0
      %260 = vmatprep.subr.bf16.mxu0 0
      %261 = vmatpush1.bf16.msra.mxu0 0
      %262 = vmatprep.subr.bf16.mxu0 0
      %263 = vmatpush1.bf16.msra.mxu0 0
      %264 = vmatprep.subr.bf16.mxu0 0
      %265 = vmatpush1.bf16.msra.mxu0 0
      %266 = vmatprep.mubr.bf16.mxu0 0
      %267 = vmatmul.mubr.bf16.gmra.mrb[0].mxu0 %v232
      %v268 = vpop.f32.mrb[0].mxu0
      %v269 = vadd.f32 0.0, %v268
      %v270 = vpop.f32.mrb[0].mxu0
      %v271 = vpop.f32.mrb[0].mxu0
      %v272 = vadd.f32 0.0, %v271
      %v273 = vpop.f32.mrb[0].mxu0
      %274 = vdwg.mxu0
      %v283 = vunpack.c.l.b16 %v186
      %v284 = vunpack.c.l.b16 %v187
      %v285 = vunpack.c.l.b16 %v188
      %v286 = vunpack.c.l.b16 %v189
      %v287 = vunpack.c.l.b16 %v190
      %v288 = vunpack.c.l.b16 %v191
      %v289 = vunpack.c.l.b16 %v192
      %v290 = vunpack.c.l.b16 %v193
      %v291 = vpack.c.b16 %v284, %v283
      %v292 = vpack.c.b16 %v286, %v285
      %v293 = vpack.c.b16 %v288, %v287
      %v294 = vpack.c.b16 %v290, %v289
      %v300 = vsel %vm230, %v185, 0
      %302 = vmatprep.subr.bf16.mxu0 0
      %303 = vmatpush1.bf16.msra.mxu0 %v291
      %304 = vmatprep.subr.bf16.mxu0 0
      %305 = vmatpush1.bf16.msra.mxu0 %v292
      %306 = vmatprep.subr.bf16.mxu0 0
      %307 = vmatpush1.bf16.msra.mxu0 %v293
      %308 = vmatprep.subr.bf16.mxu0 0
      %309 = vmatpush1.bf16.msra.mxu0 %v294
      %310 = vmatprep.subr.bf16.mxu0 0
      %311 = vmatpush1.bf16.msra.mxu0 0
      %312 = vmatprep.subr.bf16.mxu0 0
      %313 = vmatpush1.bf16.msra.mxu0 0
      %314 = vmatprep.subr.bf16.mxu0 0
      %315 = vmatpush1.bf16.msra.mxu0 0
      %316 = vmatprep.subr.bf16.mxu0 0
      %317 = vmatpush1.bf16.msra.mxu0 0
      %318 = vmatprep.subr.bf16.mxu0 0
      %319 = vmatpush1.bf16.msra.mxu0 0
      %320 = vmatprep.subr.bf16.mxu0 0
      %321 = vmatpush1.bf16.msra.mxu0 0
      %322 = vmatprep.subr.bf16.mxu0 0
      %323 = vmatpush1.bf16.msra.mxu0 0
      %324 = vmatprep.subr.bf16.mxu0 0
      %325 = vmatpush1.bf16.msra.mxu0 0
      %326 = vmatprep.subr.bf16.mxu0 0
      %327 = vmatpush1.bf16.msra.mxu0 0
      %328 = vmatprep.subr.bf16.mxu0 0
      %329 = vmatpush1.bf16.msra.mxu0 0
      %330 = vmatprep.subr.bf16.mxu0 0
      %331 = vmatpush1.bf16.msra.mxu0 0
      %332 = vmatprep.subr.bf16.mxu0 0
      %333 = vmatpush1.bf16.msra.mxu0 0
      %334 = vmatprep.mubr.bf16.mxu0 0
      %335 = vmatmul.mubr.bf16.gmra.mrb[0].mxu0 %v300
      %v336 = vpop.f32.mrb[0].mxu0
      %v337 = vadd.f32 %v269, %v336
      %v338 = vpop.f32.mrb[0].mxu0
      %v339 = vpop.f32.mrb[0].mxu0
      %v340 = vadd.f32 %v272, %v339
      %v341 = vpop.f32.mrb[0].mxu0
      %342 = vdwg.mxu0
      %v343 = vld [vmem:[%s172 + $0x2] sm:$0xff]
      %v344 = vld [vmem:[%s172 + $0xa] sm:$0xff]
      %v345 = vpack.c.bf16 %v344, %v343
      %s346 = scalar_lea.vmem %s1, 64
      %v347 = vld [vmem:[%s346] sm:$0xf]
      %v348 = vld [vmem:[%s346 + $0x4] sm:$0xf]
      %v349 = vld [vmem:[%s346 + $0x8] sm:$0xf]
      %v350 = vld [vmem:[%s346 + $0xc] sm:$0xf]
      %v351 = vld [vmem:[%s346 + $0x10] sm:$0xf]
      %v352 = vld [vmem:[%s346 + $0x14] sm:$0xf]
      %v353 = vld [vmem:[%s346 + $0x18] sm:$0xf]
      %v354 = vld [vmem:[%s346 + $0x1c] sm:$0xf]
      %v363 = vunpack.c.l.b16 %v347
      %v364 = vunpack.c.l.b16 %v348
      %v365 = vunpack.c.l.b16 %v349
      %v366 = vunpack.c.l.b16 %v350
      %v367 = vunpack.c.l.b16 %v351
      %v368 = vunpack.c.l.b16 %v352
      %v369 = vunpack.c.l.b16 %v353
      %v370 = vunpack.c.l.b16 %v354
      %v371 = vpack.c.b16 %v364, %v363
      %v372 = vpack.c.b16 %v366, %v365
      %v373 = vpack.c.b16 %v368, %v367
      %v374 = vpack.c.b16 %v370, %v369
      %v380 = vsel %vm230, %v345, 0
      %382 = vmatprep.subr.bf16.mxu0 0
      %383 = vmatpush1.bf16.msra.mxu0 %v371
      %384 = vmatprep.subr.bf16.mxu0 0
      %385 = vmatpush1.bf16.msra.mxu0 %v372
      %386 = vmatprep.subr.bf16.mxu0 0
      %387 = vmatpush1.bf16.msra.mxu0 %v373
      %388 = vmatprep.subr.bf16.mxu0 0
      %389 = vmatpush1.bf16.msra.mxu0 %v374
      %390 = vmatprep.subr.bf16.mxu0 0
      %391 = vmatpush1.bf16.msra.mxu0 0
      %392 = vmatprep.subr.bf16.mxu0 0
      %393 = vmatpush1.bf16.msra.mxu0 0
      %394 = vmatprep.subr.bf16.mxu0 0
      %395 = vmatpush1.bf16.msra.mxu0 0
      %396 = vmatprep.subr.bf16.mxu0 0
      %397 = vmatpush1.bf16.msra.mxu0 0
      %398 = vmatprep.subr.bf16.mxu0 0
      %399 = vmatpush1.bf16.msra.mxu0 0
      %400 = vmatprep.subr.bf16.mxu0 0
      %401 = vmatpush1.bf16.msra.mxu0 0
      %402 = vmatprep.subr.bf16.mxu0 0
      %403 = vmatpush1.bf16.msra.mxu0 0
      %404 = vmatprep.subr.bf16.mxu0 0
      %405 = vmatpush1.bf16.msra.mxu0 0
      %406 = vmatprep.subr.bf16.mxu0 0
      %407 = vmatpush1.bf16.msra.mxu0 0
      %408 = vmatprep.subr.bf16.mxu0 0
      %409 = vmatpush1.bf16.msra.mxu0 0
      %410 = vmatprep.subr.bf16.mxu0 0
      %411 = vmatpush1.bf16.msra.mxu0 0
      %412 = vmatprep.subr.bf16.mxu0 0
      %413 = vmatpush1.bf16.msra.mxu0 0
      %414 = vmatprep.mubr.bf16.mxu0 0
      %415 = vmatmul.mubr.bf16.gmra.mrb[0].mxu0 %v380
      %v416 = vpop.f32.mrb[0].mxu0
      %v417 = vadd.f32 0.0, %v416
      %v418 = vpop.f32.mrb[0].mxu0
      %v419 = vpop.f32.mrb[0].mxu0
      %v420 = vadd.f32 0.0, %v419
      %v421 = vpop.f32.mrb[0].mxu0
      %422 = vdwg.mxu0
      %v423 = vadd.f32 %v337, %v417
      %v424 = vadd.f32 %v340, %v420
      %425 = vst [vmem:[%s177] sm:$0xff] %v423
      %426 = vst [vmem:[%s177 + $0x8] sm:$0xff] %v424
      %v427 = vadd.f32 %v423, %v424
      %v428 = vrot.slane %v427, 4
      %v429 = vadd.f32 %v427, %v428
      %v430 = vrot.slane %v429, 2
      %v431 = vadd.f32 %v429, %v430
      %v432 = vrot.slane %v431, 1
      %v433 = vadd.f32 %v431, %v432
      %434 = vst [vmem:[%s181] sm:$0x1] %v433
      %v435 = vmul.f32 %v423, %v423
      %v436 = vmul.f32 %v424, %v424
      %v437 = vadd.f32 %v435, %v436
      %v438 = vrot.slane %v437, 4
      %v439 = vadd.f32 %v437, %v438
      %v440 = vrot.slane %v439, 2
      %v441 = vadd.f32 %v439, %v440
      %v442 = vrot.slane %v441, 1
      %v443 = vadd.f32 %v441, %v442
      %444 = vst [vmem:[%s181 + $0x1] sm:$0x1] %v443
      %p445 = scmp.lt.s32.totalorder %s15, 1
      %s446 = scalar_select %p445, %s15, 1
      %s447 = smul.addr %s446, 2
      %s448 = smul.addr %s447, 8
      %s449 = scalar_lea.vmem %s2, %s448
      %p450 = scmp.lt.s32.totalorder %s15, 1
      %s451 = scalar_select %p450, %s15, 1
      %s452 = smul.addr %s451, 2
      %s453 = scalar_lea.vmem %s3, %s452
      // Predicated region
      $region29: #{conv_block_forward.3} parent=27 // pred_check
        %p454 = pneg %p80
      $region30: #{conv_block_forward.3} parent=27 // pred_check_branch
        %456 = sbr.rel (%p454) target = $region32
      $region31: #{conv_block_forward.3} parent=27 // pred_region
        _
      $region32: #{conv_block_forward.3} parent=27 // pred_fallthru
        _
      // Predicated region
      $region33: #{conv_block_forward.3} parent=27 // pred_check
        %p457 = pneg %p106
      $region34: #{conv_block_forward.3} parent=27 // pred_check_branch
        %459 = sbr.rel (%p457) target = $region36
      $region35: #{conv_block_forward.3} parent=27 // pred_region
        _
      $region36: #{conv_block_forward.3} parent=27 // pred_fallthru
        _
    $region28: #{conv_block_forward.3} parent=5 // pred_fallthru
      _
    %p460 = scmp.le.s32.totalorder 2, %s10
    // Predicated region
    $region37: #{conv_block_forward.3} parent=5 // pred_check
      %p461 = pneg %p460
    $region38: #{conv_block_forward.3} parent=5 // pred_check_branch
      %463 = sbr.rel (%p461) target = $region40
    $region39: #{conv_block_forward.3} parent=5 // pred_region
      %s464 = ssub.s32 %s10, 2
      // Predicated region
      $region41: #{conv_block_forward.3} parent=39 // pred_check
        %p465 = pneg %p86
      $region42: #{conv_block_forward.3} parent=39 // pred_check_branch
        %467 = sbr.rel (%p465) target = $region44
      $region43: #{conv_block_forward.3} parent=39 // pred_region
        %p468 = scmp.lt.s32.totalorder %s16, 1
        %s469 = scalar_select %p468, %s16, 1
        %s470 = smul.addr %s469, 2
        %s471 = smul.addr %s470, 8
        %s472 = scalar_lea.vmem %s2, %s471
      $region44: #{conv_block_forward.3} parent=39 // pred_fallthru
        _
      // Predicated region
      $region45: #{conv_block_forward.3} parent=39 // pred_check
        %p473 = pneg %p112
      $region46: #{conv_block_forward.3} parent=39 // pred_check_branch
        %475 = sbr.rel (%p473) target = $region48
      $region47: #{conv_block_forward.3} parent=39 // pred_region
        %p476 = scmp.lt.s32.totalorder %s16, 1
        %s477 = scalar_select %p476, %s16, 1
        %s478 = smul.addr %s477, 2
        %s479 = scalar_lea.vmem %s3, %s478
      $region48: #{conv_block_forward.3} parent=39 // pred_fallthru
        _
    $region40: #{conv_block_forward.3} parent=5 // pred_fallthru
      _
  $region6: #{conv_block_forward.3} parent=0 // loop_footer
    %s14 = sadd.s32 1, %s10
  $region7: #{conv_block_forward.3} parent=0 // loop_footer_branch
    %9 = sbr.rel target = $region3
  $region8: #{conv_block_forward.3} parent=0 // loop_exit
    _

// kernel: squeeze.4
$region0: #{squeeze.4}
  %s0 = inlined_call_operand.vmem [shape: f32[128], index: 0, kind: input, shape index: {}]
  %s1 = inlined_call_operand.vmem [shape: f32[16,8], index: 1, kind: output, shape index: {}]
  $region1: #{squeeze.4} parent=0
    #allocation0 [shape = 'u8[4096]{0}', space=vmem, size = 0x1000, scoped, tag = 'scoped mem for input reshape']
    %s3 = sshllo.u32 0, 1
    %v4 = vld [vmem:[%s0] sm:%s3]
    %5 = vst [vmem:[#allocation0] sm:%s3] %v4
    %v6 = vld [vmem:[#allocation0] sm:$0x1]
    %vm7 = vcmask 64512
    %8 = vst.msk [vmem:[%s1] sm:$0x1] %vm7, %v6
    %v9 = vld [vmem:[#allocation0] sm:$0x1]
    %10 = vrot.lane.b32.xlu0 %v9, 120
    %v11 = vpop.permute.xlu0 %10
    %vm12 = vcmask 64512
    %s13 = scalar_lea.vmem %s1, 1
    %14 = vst.msk [vmem:[%s13] sm:$0x1] %vm12, %v11
    %v15 = vld [vmem:[#allocation0] sm:$0x1]
    %16 = vrot.lane.b32.xlu0 %v15, 112
    %v17 = vpop.permute.xlu0 %16
    %vm18 = vcmask 64512
    %s19 = scalar_lea.vmem %s1, 2
    %20 = vst.msk [vmem:[%s19] sm:$0x1] %vm18, %v17
    %v21 = vld [vmem:[#allocation0] sm:$0x1]
    %22 = vrot.lane.b32.xlu0 %v21, 104
    %v23 = vpop.permute.xlu0 %22
    %vm24 = vcmask 64512
    %s25 = scalar_lea.vmem %s1, 3
    %26 = vst.msk [vmem:[%s25] sm:$0x1] %vm24, %v23
    %v27 = vld [vmem:[#allocation0] sm:$0x1]
    %28 = vrot.lane.b32.xlu0 %v27, 96
    %v29 = vpop.permute.xlu0 %28
    %vm30 = vcmask 64512
    %s31 = scalar_lea.vmem %s1, 4
    %32 = vst.msk [vmem:[%s31] sm:$0x1] %vm30, %v29
    %v33 = vld [vmem:[#allocation0] sm:$0x1]
    %34 = vrot.lane.b32.xlu0 %v33, 88
    %v35 = vpop.permute.xlu0 %34
    %vm36 = vcmask 64512
    %s37 = scalar_lea.vmem %s1, 5
    %38 = vst.msk [vmem:[%s37] sm:$0x1] %vm36, %v35
    %v39 = vld [vmem:[#allocation0] sm:$0x1]
    %40 = vrot.lane.b32.xlu0 %v39, 80
    %v41 = vpop.permute.xlu0 %40
    %vm42 = vcmask 64512
    %s43 = scalar_lea.vmem %s1, 6
    %44 = vst.msk [vmem:[%s43] sm:$0x1] %vm42, %v41
    %v45 = vld [vmem:[#allocation0] sm:$0x1]
    %46 = vrot.lane.b32.xlu0 %v45, 72
    %v47 = vpop.permute.xlu0 %46
    %vm48 = vcmask 64512
    %s49 = scalar_lea.vmem %s1, 7
    %50 = vst.msk [vmem:[%s49] sm:$0x1] %vm48, %v47
    %v51 = vld [vmem:[#allocation0] sm:$0x1]
    %52 = vrot.lane.b32.xlu0 %v51, 64
    %v53 = vpop.permute.xlu0 %52
    %vm54 = vcmask 64512
    %s55 = scalar_lea.vmem %s1, 8
    %56 = vst.msk [vmem:[%s55] sm:$0x1] %vm54, %v53
    %v57 = vld [vmem:[#allocation0] sm:$0x1]
    %58 = vrot.lane.b32.xlu0 %v57, 56
    %v59 = vpop.permute.xlu0 %58
    %vm60 = vcmask 64512
    %s61 = scalar_lea.vmem %s1, 9
    %62 = vst.msk [vmem:[%s61] sm:$0x1] %vm60, %v59
    %v63 = vld [vmem:[#allocation0] sm:$0x1]
    %64 = vrot.lane.b32.xlu0 %v63, 48
    %v65 = vpop.permute.xlu0 %64
    %vm66 = vcmask 64512
    %s67 = scalar_lea.vmem %s1, 10
    %68 = vst.msk [vmem:[%s67] sm:$0x1] %vm66, %v65
    %v69 = vld [vmem:[#allocation0] sm:$0x1]
    %70 = vrot.lane.b32.xlu0 %v69, 40
    %v71 = vpop.permute.xlu0 %70
    %vm72 = vcmask 64512
    %s73 = scalar_lea.vmem %s1, 11
    %74 = vst.msk [vmem:[%s73] sm:$0x1] %vm72, %v71
    %v75 = vld [vmem:[#allocation0] sm:$0x1]
    %76 = vrot.lane.b32.xlu0 %v75, 32
    %v77 = vpop.permute.xlu0 %76
    %vm78 = vcmask 64512
    %s79 = scalar_lea.vmem %s1, 12
    %80 = vst.msk [vmem:[%s79] sm:$0x1] %vm78, %v77
    %v81 = vld [vmem:[#allocation0] sm:$0x1]
    %82 = vrot.lane.b32.xlu0 %v81, 24
    %v83 = vpop.permute.xlu0 %82
    %vm84 = vcmask 64512
    %s85 = scalar_lea.vmem %s1, 13
    %86 = vst.msk [vmem:[%s85] sm:$0x1] %vm84, %v83
    %v87 = vld [vmem:[#allocation0] sm:$0x1]
    %88 = vrot.lane.b32.xlu0 %v87, 16
    %v89 = vpop.permute.xlu0 %88
    %vm90 = vcmask 64512
    %s91 = scalar_lea.vmem %s1, 14
    %92 = vst.msk [vmem:[%s91] sm:$0x1] %vm90, %v89
    %v93 = vld [vmem:[#allocation0] sm:$0x1]
    %94 = vrot.lane.b32.xlu0 %v93, 8
    %v95 = vpop.permute.xlu0 %94
    %vm96 = vcmask 64512
    %s97 = scalar_lea.vmem %s1, 15
    %98 = vst.msk [vmem:[%s97] sm:$0x1] %vm96, %v95

// kernel: tile.28
$region0: #{tile.28}
  #allocation0 [shape = 's32[1]{0}', space=sflag, size = 0x4, scoped, tag = 'scoped memory for tile.28']
  %s0 = inlined_call_operand.vmem [shape: f32[8], index: 0, kind: input, shape index: {}]
  %s1 = inlined_call_operand.vmem [shape: f32[16,8], index: 1, kind: output, shape index: {}]
  // Predicated region
  $region2: #{tile.28} parent=0 // pred_check
    _
  $region3: #{tile.28} parent=0 // pred_check_branch
    %3 = sbr.rel (0) target = $region5
  $region4: #{tile.28} parent=0 // pred_region
    _
  $region5: #{tile.28} parent=0 // pred_fallthru
    _
  %v4 = vld [vmem:[%s0] ss:$0 sm:$0xff]
  %5 = vst [vmem:[%s1] sm:$0xff] %v4
  %s6 = scalar_lea.vmem %s1, 8
  %7 = vst [vmem:[%s6] sm:$0xff] %v4

// kernel: tile.29
$region0: #{tile.29}
  %s0 = inlined_call_operand.vmem [shape: f32[16,8], index: 0, kind: input, shape index: {}]
  %s1 = inlined_call_operand.vmem [shape: f32[1,128], index: 1, kind: output, shape index: {}]
  $region1: #{tile.29} parent=0
    #allocation0 [shape = 'u8[4096]{0}', space=vmem, size = 0x1000, scoped, tag = 'scoped mem for output reshape']
    %v2 = vld [vmem:[%s0] sm:$0x1]
    %vm3 = vcmask 64512
    %4 = vst.msk [vmem:[#allocation0] sm:$0x1] %vm3, %v2
    %s5 = scalar_lea.vmem %s0, 15
    %v6 = vld [vmem:[%s5] sm:$0x1]
    %7 = vrot.lane.b32.xlu0 %v6, 120
    %v8 = vpop.permute.xlu0 %7
    %vm9 = vcmask 1048512
    %10 = vst.msk [vmem:[#allocation0] sm:$0x1] %vm9, %v8
    %s11 = scalar_lea.vmem %s0, 14
    %v12 = vld [vmem:[%s11] sm:$0x1]
    %13 = vrot.lane.b32.xlu0 %v12, 112
    %v14 = vpop.permute.xlu0 %13
    %vm15 = vcmask 982912
    %16 = vst.msk [vmem:[#allocation0] sm:$0x1] %vm15, %v14
    %s17 = scalar_lea.vmem %s0, 13
    %v18 = vld [vmem:[%s17] sm:$0x1]
    %19 = vrot.lane.b32.xlu0 %v18, 104
    %v20 = vpop.permute.xlu0 %19
    %vm21 = vcmask 917312
    %22 = vst.msk [vmem:[#allocation0] sm:$0x1] %vm21, %v20
    %s23 = scalar_lea.vmem %s0, 12
    %v24 = vld [vmem:[%s23] sm:$0x1]
    %25 = vrot.lane.b32.xlu0 %v24, 96
    %v26 = vpop.permute.xlu0 %25
    %vm27 = vcmask 851712
    %28 = vst.msk [vmem:[#allocation0] sm:$0x1] %vm27, %v26
    %s29 = scalar_lea.vmem %s0, 11
    %v30 = vld [vmem:[%s29] sm:$0x1]
    %31 = vrot.lane.b32.xlu0 %v30, 88
    %v32 = vpop.permute.xlu0 %31
    %vm33 = vcmask 786112
    %34 = vst.msk [vmem:[#allocation0] sm:$0x1] %vm33, %v32
    %s35 = scalar_lea.vmem %s0, 10
    %v36 = vld [vmem:[%s35] sm:$0x1]
    %37 = vrot.lane.b32.xlu0 %v36, 80
    %v38 = vpop.permute.xlu0 %37
    %vm39 = vcmask 720512
    %40 = vst.msk [vmem:[#allocation0] sm:$0x1] %vm39, %v38
    %s41 = scalar_lea.vmem %s0, 9
    %v42 = vld [vmem:[%s41] sm:$0x1]
    %43 = vrot.lane.b32.xlu0 %v42, 72
    %v44 = vpop.permute.xlu0 %43
    %vm45 = vcmask 654912
    %46 = vst.msk [vmem:[#allocation0] sm:$0x1] %vm45, %v44
    %s47 = scalar_lea.vmem %s0, 8
    %v48 = vld [vmem:[%s47] sm:$0x1]
    %49 = vrot.lane.b32.xlu0 %v48, 64
    %v50 = vpop.permute.xlu0 %49
    %vm51 = vcmask 589312
    %52 = vst.msk [vmem:[#allocation0] sm:$0x1] %vm51, %v50
    %s53 = scalar_lea.vmem %s0, 7
    %v54 = vld [vmem:[%s53] sm:$0x1]
    %55 = vrot.lane.b32.xlu0 %v54, 56
    %v56 = vpop.permute.xlu0 %55
    %vm57 = vcmask 523712
    %58 = vst.msk [vmem:[#allocation0] sm:$0x1] %vm57, %v56
    %s59 = scalar_lea.vmem %s0, 6
    %v60 = vld [vmem:[%s59] sm:$0x1]
    %61 = vrot.lane.b32.xlu0 %v60, 48
    %v62 = vpop.permute.xlu0 %61
    %vm63 = vcmask 458112
    %64 = vst.msk [vmem:[#allocation0] sm:$0x1] %vm63, %v62
    %s65 = scalar_lea.vmem %s0, 5
    %v66 = vld [vmem:[%s65] sm:$0x1]
    %67 = vrot.lane.b32.xlu0 %v66, 40
    %v68 = vpop.permute.xlu0 %67
    %vm69 = vcmask 392512
    %70 = vst.msk [vmem:[#allocation0] sm:$0x1] %vm69, %v68
    %s71 = scalar_lea.vmem %s0, 4
    %v72 = vld [vmem:[%s71] sm:$0x1]
    %73 = vrot.lane.b32.xlu0 %v72, 32
    %v74 = vpop.permute.xlu0 %73
    %vm75 = vcmask 326912
    %76 = vst.msk [vmem:[#allocation0] sm:$0x1] %vm75, %v74
    %s77 = scalar_lea.vmem %s0, 3
    %v78 = vld [vmem:[%s77] sm:$0x1]
    %79 = vrot.lane.b32.xlu0 %v78, 24
    %v80 = vpop.permute.xlu0 %79
    %vm81 = vcmask 261312
    %82 = vst.msk [vmem:[#allocation0] sm:$0x1] %vm81, %v80
    %s83 = scalar_lea.vmem %s0, 2
    %v84 = vld [vmem:[%s83] sm:$0x1]
    %85 = vrot.lane.b32.xlu0 %v84, 16
    %v86 = vpop.permute.xlu0 %85
    %vm87 = vcmask 195712
    %88 = vst.msk [vmem:[#allocation0] sm:$0x1] %vm87, %v86
    %s89 = scalar_lea.vmem %s0, 1
    %v90 = vld [vmem:[%s89] sm:$0x1]
    %91 = vrot.lane.b32.xlu0 %v90, 8
    %v92 = vpop.permute.xlu0 %91
    %vm93 = vcmask 130112
    %94 = vst.msk [vmem:[#allocation0] sm:$0x1] %vm93, %v92
    %s96 = sshllo.u32 0, 1
    %v98 = vld [vmem:[#allocation0] sm:%s96]
    %s99 = sshllo.u32 0, 1
    %100 = vst [vmem:[%s1] sm:%s99] %v98

// kernel: conv_block_forward.4
$region0: #{conv_block_forward.4}
  #allocation0 [shape = 'u32[]', space=smem, size = 0x4, offset = 0x4, fixed_abs, tag = 'smem constant byte address 0x4 - core index']
  #allocation1 [shape = 'u32[144,128]{1,0:T(1,128)}', space=vmem, size = 0x12000, scoped, tag = 'internal scratch']
  #allocation2 [shape = 'f32[18,128]{1,0:T(8,128)}', space=vmem, size = 0x3000, scoped, tag = 'scratch operand']
  %s0 = inlined_call_operand.vmem [shape: f32[2,16,128], index: 0, kind: input, shape index: {}]
  %s1 = inlined_call_operand.vmem [shape: f32[1,128], index: 1, kind: input, shape index: {}]
  %s2 = inlined_call_operand.vmem [shape: f32[1,128], index: 2, kind: input, shape index: {}]
  %s3 = inlined_call_operand.vmem [shape: bf16[3,128,128], index: 3, kind: input, shape index: {}]
  %s4 = inlined_call_operand.vmem [shape: f32[2,16,128], index: 4, kind: output, shape index: {0}]
  %s5 = inlined_call_operand.vmem [shape: f32[2,2,128], index: 5, kind: output, shape index: {1}]
  %6 = xla_tuple %s4, %s5
  %s7 = sld [smem:[#allocation0]]
  $region57: #{conv_block_forward.4} parent=0
    _
  %s9 = ssub.s32 1, %s7
  %s10 = scalar_select 0, %s9, %s7
  loop: start=0, step=1, limit=4
  $region2: #{conv_block_forward.4} parent=0 // loop_pre_header
    _
  $region3: #{conv_block_forward.4} parent=0 // loop_header
    %s12 = sphi 0, %s16
    %p13 = scmp.ge.s32.totalorder %s12, 4
    %s22 = sphi 0, %s24
    %s25 = sphi 0, %s22
    %s26 = sphi 0, %s25
    %s42 = sphi 0, %s26
    %s46 = sphi 0, %s46
    %s48 = sphi 0, %s46
    %s49 = sphi 0, %s48
    %s63 = sphi 0, %s49
    %s67 = sphi 0, %s67
    %s69 = sphi 0, %s67
    %s70 = sphi 0, %s69
    %s84 = sphi 0, %s70
    %s88 = sphi 0, %s88
    %s90 = sphi 0, %s88
    %s91 = sphi 0, %s90
    %s105 = sphi 0, %s91
    %s111 = sphi 0, %s113
    %s114 = sphi 0, %s111
    %s115 = sphi 0, %s114
    %s131 = sphi 0, %s115
    %s137 = sphi 0, %s139
    %s140 = sphi 0, %s137
    %s141 = sphi 0, %s140
    %s157 = sphi 0, %s141
  $region4: #{conv_block_forward.4} parent=0 // loop_header_branch
    %15 = sbr.rel (%p13) target = $region8
  $region5: #{conv_block_forward.4} parent=0 // loop_body
    %s17 = ssub.s32 %s12, 1
    %s18 = ssub.s32 %s12, 2
    %s19 = sadd.s32 %s12, 1
    %s20 = ssub.s32 %s12, %s19
    %p21 = scmp.eq.s32.totalorder %s20, 0
    %s23 = sadd.s32 %s22, 1
    %s24 = scalar_select %p21, %s22, %s23
    %p27 = pneg %p21
    %p28 = scmp.eq.s32.totalorder %s12, 1
    %p29 = por %p27, %p28
    %p30 = scmp.ne.s32.totalorder %s22, %s25
    %p31 = scmp.eq.s32.totalorder %s12, 0
    %p32 = por %p30, %p31
    %p33 = scmp.ne.s32.totalorder %s22, %s25
    %p34 = scmp.eq.s32.totalorder %s17, 1
    %p35 = por %p33, %p34
    %p36 = scmp.ne.s32.totalorder %s25, %s26
    %p37 = scmp.eq.s32.totalorder %s17, 0
    %p38 = por %p36, %p37
    %p39 = scmp.ne.s32.totalorder %s25, %s26
    %p40 = scmp.eq.s32.totalorder %s18, 1
    %p41 = por %p39, %p40
    %p43 = scmp.ne.s32.totalorder %s26, %s42
    %p44 = scmp.eq.s32.totalorder %s18, 0
    %p45 = por %p43, %p44
    %s47 = sadd.s32 %s46, 1
    %p50 = scmp.eq.s32.totalorder %s12, 1
    %p51 = scmp.ne.s32.totalorder %s46, %s48
    %p52 = scmp.eq.s32.totalorder %s12, 0
    %p53 = por %p51, %p52
    %p54 = scmp.ne.s32.totalorder %s46, %s48
    %p55 = scmp.eq.s32.totalorder %s17, 1
    %p56 = por %p54, %p55
    %p57 = scmp.ne.s32.totalorder %s48, %s49
    %p58 = scmp.eq.s32.totalorder %s17, 0
    %p59 = por %p57, %p58
    %p60 = scmp.ne.s32.totalorder %s48, %s49
    %p61 = scmp.eq.s32.totalorder %s18, 1
    %p62 = por %p60, %p61
    %p64 = scmp.ne.s32.totalorder %s49, %s63
    %p65 = scmp.eq.s32.totalorder %s18, 0
    %p66 = por %p64, %p65
    %s68 = sadd.s32 %s67, 1
    %p71 = scmp.eq.s32.totalorder %s12, 1
    %p72 = scmp.ne.s32.totalorder %s67, %s69
    %p73 = scmp.eq.s32.totalorder %s12, 0
    %p74 = por %p72, %p73
    %p75 = scmp.ne.s32.totalorder %s67, %s69
    %p76 = scmp.eq.s32.totalorder %s17, 1
    %p77 = por %p75, %p76
    %p78 = scmp.ne.s32.totalorder %s69, %s70
    %p79 = scmp.eq.s32.totalorder %s17, 0
    %p80 = por %p78, %p79
    %p81 = scmp.ne.s32.totalorder %s69, %s70
    %p82 = scmp.eq.s32.totalorder %s18, 1
    %p83 = por %p81, %p82
    %p85 = scmp.ne.s32.totalorder %s70, %s84
    %p86 = scmp.eq.s32.totalorder %s18, 0
    %p87 = por %p85, %p86
    %s89 = sadd.s32 %s88, 1
    %p92 = scmp.eq.s32.totalorder %s12, 1
    %p93 = scmp.ne.s32.totalorder %s88, %s90
    %p94 = scmp.eq.s32.totalorder %s12, 0
    %p95 = por %p93, %p94
    %p96 = scmp.ne.s32.totalorder %s88, %s90
    %p97 = scmp.eq.s32.totalorder %s17, 1
    %p98 = por %p96, %p97
    %p99 = scmp.ne.s32.totalorder %s90, %s91
    %p100 = scmp.eq.s32.totalorder %s17, 0
    %p101 = por %p99, %p100
    %p102 = scmp.ne.s32.totalorder %s90, %s91
    %p103 = scmp.eq.s32.totalorder %s18, 1
    %p104 = por %p102, %p103
    %p106 = scmp.ne.s32.totalorder %s91, %s105
    %p107 = scmp.eq.s32.totalorder %s18, 0
    %p108 = por %p106, %p107
    %s109 = ssub.s32 %s12, %s19
    %p110 = scmp.eq.s32.totalorder %s109, 0
    %s112 = sadd.s32 %s111, 1
    %s113 = scalar_select %p110, %s111, %s112
    %p116 = pneg %p110
    %p117 = scmp.eq.s32.totalorder %s12, 1
    %p118 = por %p116, %p117
    %p119 = scmp.ne.s32.totalorder %s111, %s114
    %p120 = scmp.eq.s32.totalorder %s12, 0
    %p121 = por %p119, %p120
    %p122 = scmp.ne.s32.totalorder %s111, %s114
    %p123 = scmp.eq.s32.totalorder %s17, 1
    %p124 = por %p122, %p123
    %p125 = scmp.ne.s32.totalorder %s114, %s115
    %p126 = scmp.eq.s32.totalorder %s17, 0
    %p127 = por %p125, %p126
    %p128 = scmp.ne.s32.totalorder %s114, %s115
    %p129 = scmp.eq.s32.totalorder %s18, 1
    %p130 = por %p128, %p129
    %p132 = scmp.ne.s32.totalorder %s115, %s131
    %p133 = scmp.eq.s32.totalorder %s18, 0
    %p134 = por %p132, %p133
    %s135 = ssub.s32 %s12, %s19
    %p136 = scmp.eq.s32.totalorder %s135, 0
    %s138 = sadd.s32 %s137, 1
    %s139 = scalar_select %p136, %s137, %s138
    %p142 = pneg %p136
    %p143 = scmp.eq.s32.totalorder %s12, 1
    %p144 = por %p142, %p143
    %p145 = scmp.ne.s32.totalorder %s137, %s140
    %p146 = scmp.eq.s32.totalorder %s12, 0
    %p147 = por %p145, %p146
    %p148 = scmp.ne.s32.totalorder %s137, %s140
    %p149 = scmp.eq.s32.totalorder %s17, 1
    %p150 = por %p148, %p149
    %p151 = scmp.ne.s32.totalorder %s140, %s141
    %p152 = scmp.eq.s32.totalorder %s17, 0
    %p153 = por %p151, %p152
    %p154 = scmp.ne.s32.totalorder %s140, %s141
    %p155 = scmp.eq.s32.totalorder %s18, 1
    %p156 = por %p154, %p155
    %p158 = scmp.ne.s32.totalorder %s141, %s157
    %p159 = scmp.eq.s32.totalorder %s18, 0
    %p160 = por %p158, %p159
    %p161 = scmp.le.s32.totalorder 1, %s12
    %p162 = scmp.lt.s32.totalorder %s12, 3
    %p163 = pnand %p161, %p162
    %p164 = pneg %p163
    // Predicated region
    $region9: #{conv_block_forward.4} parent=5 // pred_check
      _
    $region10: #{conv_block_forward.4} parent=5 // pred_check_branch
      %166 = sbr.rel (%p163) target = $region12
    $region11: #{conv_block_forward.4} parent=5 // pred_region
      %s167 = ssub.s32 %s12, 1
      // Predicated region
      $region13: #{conv_block_forward.4} parent=11 // pred_check
        %p168 = pneg %p59
      $region14: #{conv_block_forward.4} parent=11 // pred_check_branch
        %170 = sbr.rel (%p168) target = $region16
      $region15: #{conv_block_forward.4} parent=11 // pred_region
        _
      $region16: #{conv_block_forward.4} parent=11 // pred_fallthru
        _
      // Predicated region
      $region17: #{conv_block_forward.4} parent=11 // pred_check
        %p171 = pneg %p80
      $region18: #{conv_block_forward.4} parent=11 // pred_check_branch
        %173 = sbr.rel (%p171) target = $region20
      $region19: #{conv_block_forward.4} parent=11 // pred_region
        _
      $region20: #{conv_block_forward.4} parent=11 // pred_fallthru
        _
      // Predicated region
      $region21: #{conv_block_forward.4} parent=11 // pred_check
        %p174 = pneg %p101
      $region22: #{conv_block_forward.4} parent=11 // pred_check_branch
        %176 = sbr.rel (%p174) target = $region24
      $region23: #{conv_block_forward.4} parent=11 // pred_region
        _
      $region24: #{conv_block_forward.4} parent=11 // pred_fallthru
        _
    $region12: #{conv_block_forward.4} parent=5 // pred_fallthru
      _
    %p177 = scmp.lt.s32.totalorder %s12, 2
    // Predicated region
    $region25: #{conv_block_forward.4} parent=5 // pred_check
      %p178 = pneg %p177
    $region26: #{conv_block_forward.4} parent=5 // pred_check_branch
      %180 = sbr.rel (%p178) target = $region28
    $region27: #{conv_block_forward.4} parent=5 // pred_region
      // Predicated region
      $region29: #{conv_block_forward.4} parent=27 // pred_check
        %p181 = pneg %p32
      $region30: #{conv_block_forward.4} parent=27 // pred_check_branch
        %183 = sbr.rel (%p181) target = $region32
      $region31: #{conv_block_forward.4} parent=27 // pred_region
        %p184 = scmp.lt.s32.totalorder %s12, 1
        %s185 = scalar_select %p184, %s12, 1
        %s186 = smul.addr %s185, 2
        %s187 = smul.addr %s186, 8
        %s188 = scalar_lea.vmem %s0, %s187
      $region32: #{conv_block_forward.4} parent=27 // pred_fallthru
        _
    $region28: #{conv_block_forward.4} parent=5 // pred_fallthru
      _
    %p189 = scmp.le.s32.totalorder 1, %s12
    %p190 = scmp.lt.s32.totalorder %s12, 3
    %p191 = pnand %p189, %p190
    %p192 = pneg %p191
    // Predicated region
    $region33: #{conv_block_forward.4} parent=5 // pred_check
      _
    $region34: #{conv_block_forward.4} parent=5 // pred_check_branch
      %194 = sbr.rel (%p191) target = $region36
    $region35: #{conv_block_forward.4} parent=5 // pred_region
      %s195 = ssub.s32 %s12, 1
      %p196 = scmp.lt.s32.totalorder %s17, 1
      %s197 = scalar_select %p196, %s17, 1
      %s198 = smul.addr %s197, 2
      %s199 = smul.addr %s198, 8
      %s200 = scalar_lea.vmem %s0, %s199
      %p201 = pneg %p38
      %p202 = pneg %p35
      %p203 = pneg %p59
      %p204 = pneg %p56
      %p205 = pneg %p80
      %p206 = pneg %p77
      %p207 = pneg %p101
      %p208 = pneg %p98
      %p209 = pneg %p127
      %p210 = pneg %p124
      %p211 = scmp.lt.s32.totalorder %s17, 1
      %s212 = scalar_select %p211, %s17, 1
      %s213 = smul.addr %s212, 2
      %s214 = smul.addr %s213, 8
      %s215 = scalar_lea.vmem %s4, %s214
      %p216 = pneg %p153
      %p217 = pneg %p150
      %p218 = scmp.lt.s32.totalorder %s17, 1
      %s219 = scalar_select %p218, %s17, 1
      %s220 = smul.addr %s219, 2
      %s221 = scalar_lea.vmem %s5, %s220
      %p222 = scmp.lt.s32.totalorder %s17, 1
      %s223 = scalar_select %p222, %s17, 1
      %s224 = smul.addr %s223, 2
      %s225 = smul.addr %s224, 8
      %s226 = scalar_lea.vmem %s0, %s225
      %p227 = scmp.lt.s32.totalorder %s17, 1
      %s228 = scalar_select %p227, %s17, 1
      %s229 = smul.addr %s228, 2
      %s230 = smul.addr %s229, 8
      %s231 = scalar_lea.vmem %s4, %s230
      %p232 = scmp.lt.s32.totalorder %s17, 1
      %s233 = scalar_select %p232, %s17, 1
      %s234 = smul.addr %s233, 2
      %s235 = scalar_lea.vmem %s5, %s234
      %v237 = vld [vmem:[%s226] sm:$0xff]
      %v238 = vld [vmem:[%s226 + $0x8] sm:$0xff]
      %v239 = vld [vmem:[%s1] sm:$0x1]
      %v241 = vlaneseq
      %v242 = vshrl.u32 %v241, 7
      %v243 = vsub.s32 0, %v242
      %v244 = vrot.slane %v239, %v243
      %v246 = vmul.f32 %v237, %v244
      %v247 = vmul.f32 %v238, %v244
      %v248 = vld [vmem:[%s2] sm:$0x1]
      %v250 = vlaneseq
      %v251 = vshrl.u32 %v250, 7
      %v252 = vsub.s32 0, %v251
      %v253 = vrot.slane %v248, %v252
      %v255 = vadd.f32 %v246, %v253
      %v256 = vadd.f32 %v247, %v253
      %v257 = vmax.f32 %v255, 0.0
      %v258 = vmax.f32 %v256, 0.0
      %259 = vst [vmem:[#allocation2] sm:$0x1] 0.0
      %260 = vst [vmem:[#allocation2 + $0x11] sm:$0x1] 0.0
      %261 = vst [vmem:[#allocation2 + $0x1] sm:$0xff] %v257
      %262 = vst [vmem:[#allocation2 + $0x9] sm:$0xff] %v258
      %v263 = vld [vmem:[#allocation2] sm:$0xff]
      %v264 = vld [vmem:[#allocation2 + $0x8] sm:$0xff]
      %v265 = vpack.c.bf16 %v264, %v263
      %v266 = vld [vmem:[%s3] sm:$0xf]
      %v267 = vld [vmem:[%s3 + $0x4] sm:$0xf]
      %v268 = vld [vmem:[%s3 + $0x8] sm:$0xf]
      %v269 = vld [vmem:[%s3 + $0xc] sm:$0xf]
      %v270 = vld [vmem:[%s3 + $0x10] sm:$0xf]
      %v271 = vld [vmem:[%s3 + $0x14] sm:$0xf]
      %v272 = vld [vmem:[%s3 + $0x18] sm:$0xf]
      %v273 = vld [vmem:[%s3 + $0x1c] sm:$0xf]
      %v274 = vld [vmem:[%s3 + $0x20] sm:$0xf]
      %v275 = vld [vmem:[%s3 + $0x24] sm:$0xf]
      %v276 = vld [vmem:[%s3 + $0x28] sm:$0xf]
      %v277 = vld [vmem:[%s3 + $0x2c] sm:$0xf]
      %v278 = vld [vmem:[%s3 + $0x30] sm:$0xf]
      %v279 = vld [vmem:[%s3 + $0x34] sm:$0xf]
      %v280 = vld [vmem:[%s3 + $0x38] sm:$0xf]
      %v281 = vld [vmem:[%s3 + $0x3c] sm:$0xf]
      %v282 = vld [vmem:[#allocation2 + $0x1] sm:$0xff]
      %v283 = vld [vmem:[#allocation2 + $0x9] sm:$0xff]
      %v284 = vpack.c.bf16 %v283, %v282
      %s285 = scalar_lea.vmem %s3, 64
      %v286 = vld [vmem:[%s285] sm:$0xf]
      %v287 = vld [vmem:[%s285 + $0x4] sm:$0xf]
      %v288 = vld [vmem:[%s285 + $0x8] sm:$0xf]
      %v289 = vld [vmem:[%s285 + $0xc] sm:$0xf]
      %v290 = vld [vmem:[%s285 + $0x10] sm:$0xf]
      %v291 = vld [vmem:[%s285 + $0x14] sm:$0xf]
      %v292 = vld [vmem:[%s285 + $0x18] sm:$0xf]
      %v293 = vld [vmem:[%s285 + $0x1c] sm:$0xf]
      %v294 = vld [vmem:[%s285 + $0x20] sm:$0xf]
      %v295 = vld [vmem:[%s285 + $0x24] sm:$0xf]
      %v296 = vld [vmem:[%s285 + $0x28] sm:$0xf]
      %v297 = vld [vmem:[%s285 + $0x2c] sm:$0xf]
      %v298 = vld [vmem:[%s285 + $0x30] sm:$0xf]
      %v299 = vld [vmem:[%s285 + $0x34] sm:$0xf]
      %v300 = vld [vmem:[%s285 + $0x38] sm:$0xf]
      %v301 = vld [vmem:[%s285 + $0x3c] sm:$0xf]
      %v318 = vunpack.c.l.b16 %v286
      %v319 = vunpack.c.l.b16 %v287
      %v320 = vunpack.c.l.b16 %v288
      %v321 = vunpack.c.l.b16 %v289
      %v322 = vunpack.c.l.b16 %v290
      %v323 = vunpack.c.l.b16 %v291
      %v324 = vunpack.c.l.b16 %v292
      %v325 = vunpack.c.l.b16 %v293
      %v326 = vunpack.c.l.b16 %v294
      %v327 = vunpack.c.l.b16 %v295
      %v328 = vunpack.c.l.b16 %v296
      %v329 = vunpack.c.l.b16 %v297
      %v330 = vunpack.c.l.b16 %v298
      %v331 = vunpack.c.l.b16 %v299
      %v332 = vunpack.c.l.b16 %v300
      %v333 = vunpack.c.l.b16 %v301
      %v334 = vpack.c.b16 %v319, %v318
      %v335 = vpack.c.b16 %v321, %v320
      %v336 = vpack.c.b16 %v323, %v322
      %v337 = vpack.c.b16 %v325, %v324
      %v338 = vpack.c.b16 %v327, %v326
      %v339 = vpack.c.b16 %v329, %v328
      %v340 = vpack.c.b16 %v331, %v330
      %v341 = vpack.c.b16 %v333, %v332
      %350 = vmatprep.subr.bf16.mxu0 0
      %351 = vmatpush1.bf16.msra.mxu0 %v334
      %352 = vmatprep.subr.bf16.mxu0 0
      %353 = vmatpush1.bf16.msra.mxu0 %v335
      %354 = vmatprep.subr.bf16.mxu0 0
      %355 = vmatpush1.bf16.msra.mxu0 %v336
      %356 = vmatprep.subr.bf16.mxu0 0
      %357 = vmatpush1.bf16.msra.mxu0 %v337
      %358 = vmatprep.subr.bf16.mxu0 0
      %359 = vmatpush1.bf16.msra.mxu0 %v338
      %360 = vmatprep.subr.bf16.mxu0 0
      %361 = vmatpush1.bf16.msra.mxu0 %v339
      %362 = vmatprep.subr.bf16.mxu0 0
      %363 = vmatpush1.bf16.msra.mxu0 %v340
      %364 = vmatprep.subr.bf16.mxu0 0
      %365 = vmatpush1.bf16.msra.mxu0 %v341
      %366 = vmatprep.subr.bf16.mxu0 0
      %367 = vmatpush1.bf16.msra.mxu0 0
      %368 = vmatprep.subr.bf16.mxu0 0
      %369 = vmatpush1.bf16.msra.mxu0 0
      %370 = vmatprep.subr.bf16.mxu0 0
      %371 = vmatpush1.bf16.msra.mxu0 0
      %372 = vmatprep.subr.bf16.mxu0 0
      %373 = vmatpush1.bf16.msra.mxu0 0
      %374 = vmatprep.subr.bf16.mxu0 0
      %375 = vmatpush1.bf16.msra.mxu0 0
      %376 = vmatprep.subr.bf16.mxu0 0
      %377 = vmatpush1.bf16.msra.mxu0 0
      %378 = vmatprep.subr.bf16.mxu0 0
      %379 = vmatpush1.bf16.msra.mxu0 0
      %380 = vmatprep.subr.bf16.mxu0 0
      %381 = vmatpush1.bf16.msra.mxu0 0
      %382 = vmatprep.mubr.bf16.mxu0 0
      %383 = vmatmul.mubr.bf16.gmra.mrb[0].mxu0 %v284
      %v384 = vpop.f32.mrb[0].mxu0
      %v385 = vadd.f32 0.0, %v384
      %v386 = vpop.f32.mrb[0].mxu0
      %v387 = vpop.f32.mrb[0].mxu0
      %v388 = vadd.f32 0.0, %v387
      %v389 = vpop.f32.mrb[0].mxu0
      %390 = vdwg.mxu0
      %v407 = vunpack.c.l.b16 %v266
      %v408 = vunpack.c.l.b16 %v267
      %v409 = vunpack.c.l.b16 %v268
      %v410 = vunpack.c.l.b16 %v269
      %v411 = vunpack.c.l.b16 %v270
      %v412 = vunpack.c.l.b16 %v271
      %v413 = vunpack.c.l.b16 %v272
      %v414 = vunpack.c.l.b16 %v273
      %v415 = vunpack.c.l.b16 %v274
      %v416 = vunpack.c.l.b16 %v275
      %v417 = vunpack.c.l.b16 %v276
      %v418 = vunpack.c.l.b16 %v277
      %v419 = vunpack.c.l.b16 %v278
      %v420 = vunpack.c.l.b16 %v279
      %v421 = vunpack.c.l.b16 %v280
      %v422 = vunpack.c.l.b16 %v281
      %v423 = vpack.c.b16 %v408, %v407
      %v424 = vpack.c.b16 %v410, %v409
      %v425 = vpack.c.b16 %v412, %v411
      %v426 = vpack.c.b16 %v414, %v413
      %v427 = vpack.c.b16 %v416, %v415
      %v428 = vpack.c.b16 %v418, %v417
      %v429 = vpack.c.b16 %v420, %v419
      %v430 = vpack.c.b16 %v422, %v421
      %439 = vmatprep.subr.bf16.mxu0 0
      %440 = vmatpush1.bf16.msra.mxu0 %v423
      %441 = vmatprep.subr.bf16.mxu0 0
      %442 = vmatpush1.bf16.msra.mxu0 %v424
      %443 = vmatprep.subr.bf16.mxu0 0
      %444 = vmatpush1.bf16.msra.mxu0 %v425
      %445 = vmatprep.subr.bf16.mxu0 0
      %446 = vmatpush1.bf16.msra.mxu0 %v426
      %447 = vmatprep.subr.bf16.mxu0 0
      %448 = vmatpush1.bf16.msra.mxu0 %v427
      %449 = vmatprep.subr.bf16.mxu0 0
      %450 = vmatpush1.bf16.msra.mxu0 %v428
      %451 = vmatprep.subr.bf16.mxu0 0
      %452 = vmatpush1.bf16.msra.mxu0 %v429
      %453 = vmatprep.subr.bf16.mxu0 0
      %454 = vmatpush1.bf16.msra.mxu0 %v430
      %455 = vmatprep.subr.bf16.mxu0 0
      %456 = vmatpush1.bf16.msra.mxu0 0
      %457 = vmatprep.subr.bf16.mxu0 0
      %458 = vmatpush1.bf16.msra.mxu0 0
      %459 = vmatprep.subr.bf16.mxu0 0
      %460 = vmatpush1.bf16.msra.mxu0 0
      %461 = vmatprep.subr.bf16.mxu0 0
      %462 = vmatpush1.bf16.msra.mxu0 0
      %463 = vmatprep.subr.bf16.mxu0 0
      %464 = vmatpush1.bf16.msra.mxu0 0
      %465 = vmatprep.subr.bf16.mxu0 0
      %466 = vmatpush1.bf16.msra.mxu0 0
      %467 = vmatprep.subr.bf16.mxu0 0
      %468 = vmatpush1.bf16.msra.mxu0 0
      %469 = vmatprep.subr.bf16.mxu0 0
      %470 = vmatpush1.bf16.msra.mxu0 0
      %471 = vmatprep.mubr.bf16.mxu0 0
      %472 = vmatmul.mubr.bf16.gmra.mrb[0].mxu0 %v265
      %v473 = vpop.f32.mrb[0].mxu0
      %v474 = vadd.f32 %v385, %v473
      %v475 = vpop.f32.mrb[0].mxu0
      %v476 = vpop.f32.mrb[0].mxu0
      %v477 = vadd.f32 %v388, %v476
      %v478 = vpop.f32.mrb[0].mxu0
      %479 = vdwg.mxu0
      %v480 = vld [vmem:[#allocation2 + $0x2] sm:$0xff]
      %v481 = vld [vmem:[#allocation2 + $0xa] sm:$0xff]
      %v482 = vpack.c.bf16 %v481, %v480
      %s483 = scalar_lea.vmem %s3, 128
      %v484 = vld [vmem:[%s483] sm:$0xf]
      %v485 = vld [vmem:[%s483 + $0x4] sm:$0xf]
      %v486 = vld [vmem:[%s483 + $0x8] sm:$0xf]
      %v487 = vld [vmem:[%s483 + $0xc] sm:$0xf]
      %v488 = vld [vmem:[%s483 + $0x10] sm:$0xf]
      %v489 = vld [vmem:[%s483 + $0x14] sm:$0xf]
      %v490 = vld [vmem:[%s483 + $0x18] sm:$0xf]
      %v491 = vld [vmem:[%s483 + $0x1c] sm:$0xf]
      %v492 = vld [vmem:[%s483 + $0x20] sm:$0xf]
      %v493 = vld [vmem:[%s483 + $0x24] sm:$0xf]
      %v494 = vld [vmem:[%s483 + $0x28] sm:$0xf]
      %v495 = vld [vmem:[%s483 + $0x2c] sm:$0xf]
      %v496 = vld [vmem:[%s483 + $0x30] sm:$0xf]
      %v497 = vld [vmem:[%s483 + $0x34] sm:$0xf]
      %v498 = vld [vmem:[%s483 + $0x38] sm:$0xf]
      %v499 = vld [vmem:[%s483 + $0x3c] sm:$0xf]
      %v516 = vunpack.c.l.b16 %v484
      %v517 = vunpack.c.l.b16 %v485
      %v518 = vunpack.c.l.b16 %v486
      %v519 = vunpack.c.l.b16 %v487
      %v520 = vunpack.c.l.b16 %v488
      %v521 = vunpack.c.l.b16 %v489
      %v522 = vunpack.c.l.b16 %v490
      %v523 = vunpack.c.l.b16 %v491
      %v524 = vunpack.c.l.b16 %v492
      %v525 = vunpack.c.l.b16 %v493
      %v526 = vunpack.c.l.b16 %v494
      %v527 = vunpack.c.l.b16 %v495
      %v528 = vunpack.c.l.b16 %v496
      %v529 = vunpack.c.l.b16 %v497
      %v530 = vunpack.c.l.b16 %v498
      %v531 = vunpack.c.l.b16 %v499
      %v532 = vpack.c.b16 %v517, %v516
      %v533 = vpack.c.b16 %v519, %v518
      %v534 = vpack.c.b16 %v521, %v520
      %v535 = vpack.c.b16 %v523, %v522
      %v536 = vpack.c.b16 %v525, %v524
      %v537 = vpack.c.b16 %v527, %v526
      %v538 = vpack.c.b16 %v529, %v528
      %v539 = vpack.c.b16 %v531, %v530
      %548 = vmatprep.subr.bf16.mxu0 0
      %549 = vmatpush1.bf16.msra.mxu0 %v532
      %550 = vmatprep.subr.bf16.mxu0 0
      %551 = vmatpush1.bf16.msra.mxu0 %v533
      %552 = vmatprep.subr.bf16.mxu0 0
      %553 = vmatpush1.bf16.msra.mxu0 %v534
      %554 = vmatprep.subr.bf16.mxu0 0
      %555 = vmatpush1.bf16.msra.mxu0 %v535
      %556 = vmatprep.subr.bf16.mxu0 0
      %557 = vmatpush1.bf16.msra.mxu0 %v536
      %558 = vmatprep.subr.bf16.mxu0 0
      %559 = vmatpush1.bf16.msra.mxu0 %v537
      %560 = vmatprep.subr.bf16.mxu0 0
      %561 = vmatpush1.bf16.msra.mxu0 %v538
      %562 = vmatprep.subr.bf16.mxu0 0
      %563 = vmatpush1.bf16.msra.mxu0 %v539
      %564 = vmatprep.subr.bf16.mxu0 0
      %565 = vmatpush1.bf16.msra.mxu0 0
      %566 = vmatprep.subr.bf16.mxu0 0
      %567 = vmatpush1.bf16.msra.mxu0 0
      %568 = vmatprep.subr.bf16.mxu0 0
      %569 = vmatpush1.bf16.msra.mxu0 0
      %570 = vmatprep.subr.bf16.mxu0 0
      %571 = vmatpush1.bf16.msra.mxu0 0
      %572 = vmatprep.subr.bf16.mxu0 0
      %573 = vmatpush1.bf16.msra.mxu0 0
      %574 = vmatprep.subr.bf16.mxu0 0
      %575 = vmatpush1.bf16.msra.mxu0 0
      %576 = vmatprep.subr.bf16.mxu0 0
      %577 = vmatpush1.bf16.msra.mxu0 0
      %578 = vmatprep.subr.bf16.mxu0 0
      %579 = vmatpush1.bf16.msra.mxu0 0
      %580 = vmatprep.mubr.bf16.mxu0 0
      %581 = vmatmul.mubr.bf16.gmra.mrb[0].mxu0 %v482
      %v582 = vpop.f32.mrb[0].mxu0
      %v583 = vadd.f32 0.0, %v582
      %v584 = vpop.f32.mrb[0].mxu0
      %v585 = vpop.f32.mrb[0].mxu0
      %v586 = vadd.f32 0.0, %v585
      %v587 = vpop.f32.mrb[0].mxu0
      %588 = vdwg.mxu0
      %v589 = vadd.f32 %v474, %v583
      %v590 = vadd.f32 %v477, %v586
      %591 = vst [vmem:[%s231] sm:$0xff] %v589
      %592 = vst [vmem:[%s231 + $0x8] sm:$0xff] %v590
      %v593 = vadd.f32 %v589, %v590
      %v594 = vrot.slane %v593, 4
      %v595 = vadd.f32 %v593, %v594
      %v596 = vrot.slane %v595, 2
      %v597 = vadd.f32 %v595, %v596
      %v598 = vrot.slane %v597, 1
      %v599 = vadd.f32 %v597, %v598
      %600 = vst [vmem:[%s235] sm:$0x1] %v599
      %v601 = vmul.f32 %v589, %v589
      %v602 = vmul.f32 %v590, %v590
      %v603 = vadd.f32 %v601, %v602
      %v604 = vrot.slane %v603, 4
      %v605 = vadd.f32 %v603, %v604
      %v606 = vrot.slane %v605, 2
      %v607 = vadd.f32 %v605, %v606
      %v608 = vrot.slane %v607, 1
      %v609 = vadd.f32 %v607, %v608
      %610 = vst [vmem:[%s235 + $0x1] sm:$0x1] %v609
      %p611 = scmp.lt.s32.totalorder %s17, 1
      %s612 = scalar_select %p611, %s17, 1
      %s613 = smul.addr %s612, 2
      %s614 = smul.addr %s613, 8
      %s615 = scalar_lea.vmem %s4, %s614
      %p616 = scmp.lt.s32.totalorder %s17, 1
      %s617 = scalar_select %p616, %s17, 1
      %s618 = smul.addr %s617, 2
      %s619 = scalar_lea.vmem %s5, %s618
      // Predicated region
      $region37: #{conv_block_forward.4} parent=35 // pred_check
        %p620 = pneg %p124
      $region38: #{conv_block_forward.4} parent=35 // pred_check_branch
        %622 = sbr.rel (%p620) target = $region40
      $region39: #{conv_block_forward.4} parent=35 // pred_region
        _
      $region40: #{conv_block_forward.4} parent=35 // pred_fallthru
        _
      // Predicated region
      $region41: #{conv_block_forward.4} parent=35 // pred_check
        %p623 = pneg %p150
      $region42: #{conv_block_forward.4} parent=35 // pred_check_branch
        %625 = sbr.rel (%p623) target = $region44
      $region43: #{conv_block_forward.4} parent=35 // pred_region
        _
      $region44: #{conv_block_forward.4} parent=35 // pred_fallthru
        _
    $region36: #{conv_block_forward.4} parent=5 // pred_fallthru
      _
    %p626 = scmp.le.s32.totalorder 2, %s12
    // Predicated region
    $region45: #{conv_block_forward.4} parent=5 // pred_check
      %p627 = pneg %p626
    $region46: #{conv_block_forward.4} parent=5 // pred_check_branch
      %629 = sbr.rel (%p627) target = $region48
    $region47: #{conv_block_forward.4} parent=5 // pred_region
      %s630 = ssub.s32 %s12, 2
      // Predicated region
      $region49: #{conv_block_forward.4} parent=47 // pred_check
        %p631 = pneg %p130
      $region50: #{conv_block_forward.4} parent=47 // pred_check_branch
        %633 = sbr.rel (%p631) target = $region52
      $region51: #{conv_block_forward.4} parent=47 // pred_region
        %p634 = scmp.lt.s32.totalorder %s18, 1
        %s635 = scalar_select %p634, %s18, 1
        %s636 = smul.addr %s635, 2
        %s637 = smul.addr %s636, 8
        %s638 = scalar_lea.vmem %s4, %s637
      $region52: #{conv_block_forward.4} parent=47 // pred_fallthru
        _
      // Predicated region
      $region53: #{conv_block_forward.4} parent=47 // pred_check
        %p639 = pneg %p156
      $region54: #{conv_block_forward.4} parent=47 // pred_check_branch
        %641 = sbr.rel (%p639) target = $region56
      $region55: #{conv_block_forward.4} parent=47 // pred_region
        %p642 = scmp.lt.s32.totalorder %s18, 1
        %s643 = scalar_select %p642, %s18, 1
        %s644 = smul.addr %s643, 2
        %s645 = scalar_lea.vmem %s5, %s644
      $region56: #{conv_block_forward.4} parent=47 // pred_fallthru
        _
    $region48: #{conv_block_forward.4} parent=5 // pred_fallthru
      _
  $region6: #{conv_block_forward.4} parent=0 // loop_footer
    %s16 = sadd.s32 1, %s12
  $region7: #{conv_block_forward.4} parent=0 // loop_footer_branch
    %11 = sbr.rel target = $region3
  $region8: #{conv_block_forward.4} parent=0 // loop_exit
    _

// kernel: conv_block_forward.5
$region0: #{conv_block_forward.5}
  #allocation0 [shape = 'u32[]', space=smem, size = 0x4, offset = 0x4, fixed_abs, tag = 'smem constant byte address 0x4 - core index']
  #allocation1 [shape = 'u32[144,128]{1,0:T(1,128)}', space=vmem, size = 0x12000, scoped, tag = 'internal scratch']
  %s0 = inlined_call_operand.vmem [shape: f32[2,16,128], index: 0, kind: input, shape index: {}]
  %s1 = inlined_call_operand.vmem [shape: f32[1,128], index: 1, kind: input, shape index: {}]
  %s2 = inlined_call_operand.vmem [shape: f32[1,128], index: 2, kind: input, shape index: {}]
  %s3 = inlined_call_operand.vmem [shape: f32[2,16,128], index: 3, kind: output, shape index: {}]
  %s4 = sld [smem:[#allocation0]]
  $region45: #{conv_block_forward.5} parent=0
    _
  %s6 = ssub.s32 1, %s4
  %s7 = scalar_select 0, %s6, %s4
  loop: start=0, step=1, limit=4
  $region2: #{conv_block_forward.5} parent=0 // loop_pre_header
    _
  $region3: #{conv_block_forward.5} parent=0 // loop_header
    %s9 = sphi 0, %s13
    %p10 = scmp.ge.s32.totalorder %s9, 4
    %s19 = sphi 0, %s21
    %s22 = sphi 0, %s19
    %s23 = sphi 0, %s22
    %s39 = sphi 0, %s23
    %s43 = sphi 0, %s43
    %s45 = sphi 0, %s43
    %s46 = sphi 0, %s45
    %s60 = sphi 0, %s46
    %s64 = sphi 0, %s64
    %s66 = sphi 0, %s64
    %s67 = sphi 0, %s66
    %s81 = sphi 0, %s67
    %s87 = sphi 0, %s89
    %s90 = sphi 0, %s87
    %s91 = sphi 0, %s90
    %s107 = sphi 0, %s91
  $region4: #{conv_block_forward.5} parent=0 // loop_header_branch
    %12 = sbr.rel (%p10) target = $region8
  $region5: #{conv_block_forward.5} parent=0 // loop_body
    %s14 = ssub.s32 %s9, 1
    %s15 = ssub.s32 %s9, 2
    %s16 = sadd.s32 %s9, 1
    %s17 = ssub.s32 %s9, %s16
    %p18 = scmp.eq.s32.totalorder %s17, 0
    %s20 = sadd.s32 %s19, 1
    %s21 = scalar_select %p18, %s19, %s20
    %p24 = pneg %p18
    %p25 = scmp.eq.s32.totalorder %s9, 1
    %p26 = por %p24, %p25
    %p27 = scmp.ne.s32.totalorder %s19, %s22
    %p28 = scmp.eq.s32.totalorder %s9, 0
    %p29 = por %p27, %p28
    %p30 = scmp.ne.s32.totalorder %s19, %s22
    %p31 = scmp.eq.s32.totalorder %s14, 1
    %p32 = por %p30, %p31
    %p33 = scmp.ne.s32.totalorder %s22, %s23
    %p34 = scmp.eq.s32.totalorder %s14, 0
    %p35 = por %p33, %p34
    %p36 = scmp.ne.s32.totalorder %s22, %s23
    %p37 = scmp.eq.s32.totalorder %s15, 1
    %p38 = por %p36, %p37
    %p40 = scmp.ne.s32.totalorder %s23, %s39
    %p41 = scmp.eq.s32.totalorder %s15, 0
    %p42 = por %p40, %p41
    %s44 = sadd.s32 %s43, 1
    %p47 = scmp.eq.s32.totalorder %s9, 1
    %p48 = scmp.ne.s32.totalorder %s43, %s45
    %p49 = scmp.eq.s32.totalorder %s9, 0
    %p50 = por %p48, %p49
    %p51 = scmp.ne.s32.totalorder %s43, %s45
    %p52 = scmp.eq.s32.totalorder %s14, 1
    %p53 = por %p51, %p52
    %p54 = scmp.ne.s32.totalorder %s45, %s46
    %p55 = scmp.eq.s32.totalorder %s14, 0
    %p56 = por %p54, %p55
    %p57 = scmp.ne.s32.totalorder %s45, %s46
    %p58 = scmp.eq.s32.totalorder %s15, 1
    %p59 = por %p57, %p58
    %p61 = scmp.ne.s32.totalorder %s46, %s60
    %p62 = scmp.eq.s32.totalorder %s15, 0
    %p63 = por %p61, %p62
    %s65 = sadd.s32 %s64, 1
    %p68 = scmp.eq.s32.totalorder %s9, 1
    %p69 = scmp.ne.s32.totalorder %s64, %s66
    %p70 = scmp.eq.s32.totalorder %s9, 0
    %p71 = por %p69, %p70
    %p72 = scmp.ne.s32.totalorder %s64, %s66
    %p73 = scmp.eq.s32.totalorder %s14, 1
    %p74 = por %p72, %p73
    %p75 = scmp.ne.s32.totalorder %s66, %s67
    %p76 = scmp.eq.s32.totalorder %s14, 0
    %p77 = por %p75, %p76
    %p78 = scmp.ne.s32.totalorder %s66, %s67
    %p79 = scmp.eq.s32.totalorder %s15, 1
    %p80 = por %p78, %p79
    %p82 = scmp.ne.s32.totalorder %s67, %s81
    %p83 = scmp.eq.s32.totalorder %s15, 0
    %p84 = por %p82, %p83
    %s85 = ssub.s32 %s9, %s16
    %p86 = scmp.eq.s32.totalorder %s85, 0
    %s88 = sadd.s32 %s87, 1
    %s89 = scalar_select %p86, %s87, %s88
    %p92 = pneg %p86
    %p93 = scmp.eq.s32.totalorder %s9, 1
    %p94 = por %p92, %p93
    %p95 = scmp.ne.s32.totalorder %s87, %s90
    %p96 = scmp.eq.s32.totalorder %s9, 0
    %p97 = por %p95, %p96
    %p98 = scmp.ne.s32.totalorder %s87, %s90
    %p99 = scmp.eq.s32.totalorder %s14, 1
    %p100 = por %p98, %p99
    %p101 = scmp.ne.s32.totalorder %s90, %s91
    %p102 = scmp.eq.s32.totalorder %s14, 0
    %p103 = por %p101, %p102
    %p104 = scmp.ne.s32.totalorder %s90, %s91
    %p105 = scmp.eq.s32.totalorder %s15, 1
    %p106 = por %p104, %p105
    %p108 = scmp.ne.s32.totalorder %s91, %s107
    %p109 = scmp.eq.s32.totalorder %s15, 0
    %p110 = por %p108, %p109
    %p111 = scmp.le.s32.totalorder 1, %s9
    %p112 = scmp.lt.s32.totalorder %s9, 3
    %p113 = pnand %p111, %p112
    %p114 = pneg %p113
    // Predicated region
    $region9: #{conv_block_forward.5} parent=5 // pred_check
      _
    $region10: #{conv_block_forward.5} parent=5 // pred_check_branch
      %116 = sbr.rel (%p113) target = $region12
    $region11: #{conv_block_forward.5} parent=5 // pred_region
      %s117 = ssub.s32 %s9, 1
      // Predicated region
      $region13: #{conv_block_forward.5} parent=11 // pred_check
        %p118 = pneg %p56
      $region14: #{conv_block_forward.5} parent=11 // pred_check_branch
        %120 = sbr.rel (%p118) target = $region16
      $region15: #{conv_block_forward.5} parent=11 // pred_region
        _
      $region16: #{conv_block_forward.5} parent=11 // pred_fallthru
        _
      // Predicated region
      $region17: #{conv_block_forward.5} parent=11 // pred_check
        %p121 = pneg %p77
      $region18: #{conv_block_forward.5} parent=11 // pred_check_branch
        %123 = sbr.rel (%p121) target = $region20
      $region19: #{conv_block_forward.5} parent=11 // pred_region
        _
      $region20: #{conv_block_forward.5} parent=11 // pred_fallthru
        _
    $region12: #{conv_block_forward.5} parent=5 // pred_fallthru
      _
    %p124 = scmp.lt.s32.totalorder %s9, 2
    // Predicated region
    $region21: #{conv_block_forward.5} parent=5 // pred_check
      %p125 = pneg %p124
    $region22: #{conv_block_forward.5} parent=5 // pred_check_branch
      %127 = sbr.rel (%p125) target = $region24
    $region23: #{conv_block_forward.5} parent=5 // pred_region
      // Predicated region
      $region25: #{conv_block_forward.5} parent=23 // pred_check
        %p128 = pneg %p29
      $region26: #{conv_block_forward.5} parent=23 // pred_check_branch
        %130 = sbr.rel (%p128) target = $region28
      $region27: #{conv_block_forward.5} parent=23 // pred_region
        %p131 = scmp.lt.s32.totalorder %s9, 1
        %s132 = scalar_select %p131, %s9, 1
        %s133 = smul.addr %s132, 2
        %s134 = smul.addr %s133, 8
        %s135 = scalar_lea.vmem %s0, %s134
      $region28: #{conv_block_forward.5} parent=23 // pred_fallthru
        _
    $region24: #{conv_block_forward.5} parent=5 // pred_fallthru
      _
    %p136 = scmp.le.s32.totalorder 1, %s9
    %p137 = scmp.lt.s32.totalorder %s9, 3
    %p138 = pnand %p136, %p137
    %p139 = pneg %p138
    // Predicated region
    $region29: #{conv_block_forward.5} parent=5 // pred_check
      _
    $region30: #{conv_block_forward.5} parent=5 // pred_check_branch
      %141 = sbr.rel (%p138) target = $region32
    $region31: #{conv_block_forward.5} parent=5 // pred_region
      %s142 = ssub.s32 %s9, 1
      %p143 = scmp.lt.s32.totalorder %s14, 1
      %s144 = scalar_select %p143, %s14, 1
      %s145 = smul.addr %s144, 2
      %s146 = smul.addr %s145, 8
      %s147 = scalar_lea.vmem %s0, %s146
      %p148 = pneg %p35
      %p149 = pneg %p32
      %p150 = pneg %p56
      %p151 = pneg %p53
      %p152 = pneg %p77
      %p153 = pneg %p74
      %p154 = pneg %p103
      %p155 = pneg %p100
      %p156 = scmp.lt.s32.totalorder %s14, 1
      %s157 = scalar_select %p156, %s14, 1
      %s158 = smul.addr %s157, 2
      %s159 = smul.addr %s158, 8
      %s160 = scalar_lea.vmem %s3, %s159
      %p161 = scmp.lt.s32.totalorder %s14, 1
      %s162 = scalar_select %p161, %s14, 1
      %s163 = smul.addr %s162, 2
      %s164 = smul.addr %s163, 8
      %s165 = scalar_lea.vmem %s0, %s164
      %p166 = scmp.lt.s32.totalorder %s14, 1
      %s167 = scalar_select %p166, %s14, 1
      %s168 = smul.addr %s167, 2
      %s169 = smul.addr %s168, 8
      %s170 = scalar_lea.vmem %s3, %s169
      %v171 = vld [vmem:[%s165] sm:$0xff]
      %v172 = vld [vmem:[%s165 + $0x8] sm:$0xff]
      %v173 = vld [vmem:[%s1] sm:$0x1]
      %v175 = vlaneseq
      %v176 = vshrl.u32 %v175, 7
      %v177 = vsub.s32 0, %v176
      %v178 = vrot.slane %v173, %v177
      %v180 = vmul.f32 %v171, %v178
      %v181 = vmul.f32 %v172, %v178
      %v182 = vld [vmem:[%s2] sm:$0x1]
      %v184 = vlaneseq
      %v185 = vshrl.u32 %v184, 7
      %v186 = vsub.s32 0, %v185
      %v187 = vrot.slane %v182, %v186
      %v189 = vadd.f32 %v180, %v187
      %v190 = vadd.f32 %v181, %v187
      %v191 = vmax.f32 %v189, 0.0
      %v192 = vmax.f32 %v190, 0.0
      %193 = vst [vmem:[%s170] sm:$0xff] %v191
      %194 = vst [vmem:[%s170 + $0x8] sm:$0xff] %v192
      %p195 = scmp.lt.s32.totalorder %s14, 1
      %s196 = scalar_select %p195, %s14, 1
      %s197 = smul.addr %s196, 2
      %s198 = smul.addr %s197, 8
      %s199 = scalar_lea.vmem %s3, %s198
      // Predicated region
      $region33: #{conv_block_forward.5} parent=31 // pred_check
        %p200 = pneg %p100
      $region34: #{conv_block_forward.5} parent=31 // pred_check_branch
        %202 = sbr.rel (%p200) target = $region36
      $region35: #{conv_block_forward.5} parent=31 // pred_region
        _
      $region36: #{conv_block_forward.5} parent=31 // pred_fallthru
        _
    $region32: #{conv_block_forward.5} parent=5 // pred_fallthru
      _
    %p203 = scmp.le.s32.totalorder 2, %s9
    // Predicated region
    $region37: #{conv_block_forward.5} parent=5 // pred_check
      %p204 = pneg %p203
    $region38: #{conv_block_forward.5} parent=5 // pred_check_branch
      %206 = sbr.rel (%p204) target = $region40
    $region39: #{conv_block_forward.5} parent=5 // pred_region
      %s207 = ssub.s32 %s9, 2
      // Predicated region
      $region41: #{conv_block_forward.5} parent=39 // pred_check
        %p208 = pneg %p106
      $region42: #{conv_block_forward.5} parent=39 // pred_check_branch
        %210 = sbr.rel (%p208) target = $region44
      $region43: #{conv_block_forward.5} parent=39 // pred_region
        %p211 = scmp.lt.s32.totalorder %s15, 1
        %s212 = scalar_select %p211, %s15, 1
        %s213 = smul.addr %s212, 2
        %s214 = smul.addr %s213, 8
        %s215 = scalar_lea.vmem %s3, %s214
      $region44: #{conv_block_forward.5} parent=39 // pred_fallthru
        _
    $region40: #{conv_block_forward.5} parent=5 // pred_fallthru
      _
  $region6: #{conv_block_forward.5} parent=0 // loop_footer
    %s13 = sadd.s32 1, %s9
  $region7: #{conv_block_forward.5} parent=0 // loop_footer_branch
    %8 = sbr.rel target = $region3
  $region8: #{conv_block_forward.5} parent=0 // loop_exit
    _

</llo_original>
